<compile_context>
chip_gen: v5e
topology: v5e:2x2
jax: 0.10.0
libtpu: 0.0.40
codegen_flags: <defaults>
</compile_context>

<pallas_src>
import functools

import jax
import jax.numpy as jnp
from jax.experimental import pallas as pl
from jax.experimental.pallas import tpu as pltpu

EPS = 1e-5


# ---------------------------------------------------------------------------
# In-kernel helpers
# ---------------------------------------------------------------------------
def _group_allreduce(v, dim, pack):
    """v: (1, pack*dim).  Sum across the `pack` lane groups (each `dim` lanes
    wide, same feature set), result replicated back to every group."""
    if pack == 1:
        return v
    tot = v[:, 0:dim]
    for g in range(1, pack):
        tot = tot + v[:, g * dim:(g + 1) * dim]
    return jnp.concatenate([tot] * pack, axis=1)


def _batchnorm_packed(h, gamma, beta, pack, batch):
    """Training-mode BatchNorm1d on a lane-packed activation.

    h: (B/pack, pack*dim) f32 -- `pack` samples per row, `dim` features each.
    Per-feature statistics reduce over the row (sublane) axis AND the `pack`
    lane groups; gamma/beta are pre-tiled to (1, pack*dim).
    """
    dim = h.shape[1] // pack
    inv_b = 1.0 / float(batch)
    mean = _group_allreduce(jnp.sum(h, axis=0, keepdims=True), dim, pack) * inv_b
    c = h - mean
    var = _group_allreduce(jnp.sum(c * c, axis=0, keepdims=True), dim, pack) * inv_b
    return c * jax.lax.rsqrt(var + EPS) * gamma + beta


def _make_fused_kernel(num_cross, num_deep, pack, batch):
    """Fused DCNv2 forward kernel for a fixed layer count / packing factor."""

    def kernel(*refs):
        idx = 0
        x_ref = refs[idx]; idx += 1
        cross_refs = []
        for _ in range(num_cross):
            cross_refs.append(refs[idx:idx + 4]); idx += 4      # (W, b, gamma, beta)
        deep_refs = []
        for _ in range(num_deep):
            deep_refs.append(refs[idx:idx + 4]); idx += 4       # (W, b, gamma, beta)
        w1c_ref, w1d_ref, b1_ref, w2_ref, b2_ref = refs[idx:idx + 5]; idx += 5
        o_ref = refs[idx]

        x0 = x_ref[...]                                         # (B/pack, pack*D) f32

        # ---- CrossNet: x <- BN(x @ W + b) * x0 + x ----
        xc = x0
        for (w_ref, b_ref, g_ref, be_ref) in cross_refs:
            h = jnp.dot(xc, w_ref[...], preferred_element_type=jnp.float32) + b_ref[...]
            xc = _batchnorm_packed(h, g_ref[...], be_ref[...], pack, batch) * x0 + xc

        # ---- DeepNet: x <- BN(relu(x @ W + b));  Dropout == identity (eval) ----
        xd = x0
        for (w_ref, b_ref, g_ref, be_ref) in deep_refs:
            h = jnp.dot(xd, w_ref[...], preferred_element_type=jnp.float32) + b_ref[...]
            xd = _batchnorm_packed(jnp.maximum(h, 0.0), g_ref[...], be_ref[...],
                                   pack, batch)

        # ---- Head: sigmoid(relu(xc @ W1c + xd @ W1d + b1) @ W2 + b2) ----
        z = (jnp.dot(xc, w1c_ref[...], preferred_element_type=jnp.float32)
             + jnp.dot(xd, w1d_ref[...], preferred_element_type=jnp.float32)
             + b1_ref[...])
        z = jnp.maximum(z, 0.0)
        logit = jnp.dot(z, w2_ref[...], preferred_element_type=jnp.float32) + b2_ref[0, 0]
        o_ref[...] = jax.nn.sigmoid(logit)                      # (B/pack, pack)

    return kernel


# ---------------------------------------------------------------------------
# One-time parameter preparation (lane packing / block-diagonal replication)
# ---------------------------------------------------------------------------
def choose_pack(batch, input_dim, max_lanes=128):
    """Largest power-of-two samples-per-row so pack*input_dim <= 128 and pack | batch."""
    p = 1
    while p * 2 * input_dim <= max_lanes and batch % (p * 2) == 0:
        p *= 2
    return p


def _block_diag(w, pack):
    if pack == 1:
        return w
    d_in, d_out = w.shape
    out = jnp.zeros((pack * d_in, pack * d_out), w.dtype)
    for g in range(pack):
        out = out.at[g * d_in:(g + 1) * d_in, g * d_out:(g + 1) * d_out].set(w)
    return out


def _tile_row(v, pack):
    return v if pack == 1 else jnp.tile(v, (1, pack))


def prepare_params(params, batch, input_dim):
    """Build lane-packed (block-diagonal) weights once; reuse across forward calls."""
    pack = choose_pack(batch, input_dim)
    prep = {"cross": [], "deep": []}
    for (w, b, g, be) in params["cross"]:
        prep["cross"].append((_block_diag(w, pack), _tile_row(b, pack),
                              _tile_row(g, pack), _tile_row(be, pack)))
    for (w, b, g, be) in params["deep"]:
        prep["deep"].append((_block_diag(w, pack), _tile_row(b, pack),
                             _tile_row(g, pack), _tile_row(be, pack)))
    w1, b1, w2, b2 = params["head"]
    w1c = _block_diag(w1[:input_dim, :], pack)       # multiplies cross output
    w1d = _block_diag(w1[input_dim:, :], pack)       # multiplies deep output
    prep["head"] = (w1c, w1d, _tile_row(b1, pack),
                    _block_diag(w2, pack), jnp.reshape(b2, (1, 1)))
    return pack, prep


# ---------------------------------------------------------------------------
# Forward wrapper: one fused pallas_call for the whole network
# ---------------------------------------------------------------------------
@functools.partial(jax.jit, static_argnames=("pack",))
def dcnv2_forward(x, prep, *, pack):
    B, D = x.shape
    if B % pack != 0:
        raise ValueError(f"batch {B} not divisible by pack {pack}")
    R = B // pack
    xp = x.reshape(R, pack * D)                      # free row-major re-pack

    num_cross = len(prep["cross"])
    num_deep = len(prep["deep"])

    inputs = [xp]
    for layer in prep["cross"]:
        inputs += list(layer)
    for layer in prep["deep"]:
        inputs += list(layer)
    w1c, w1d, b1, w2, b2 = prep["head"]
    inputs += [w1c, w1d, b1, w2, b2]

    vmem = pl.BlockSpec(memory_space=pltpu.MemorySpace.VMEM)
    smem = pl.BlockSpec(memory_space=pltpu.MemorySpace.SMEM)
    in_specs = [vmem] * (len(inputs) - 1) + [smem]   # b2 scalar lives in SMEM

    # Advisory cost estimate (packed shapes).
    flops = 0
    for w in ([l[0] for l in prep["cross"]] + [l[0] for l in prep["deep"]]
              + [w1c, w1d, w2]):
        flops += 2 * R * w.shape[0] * w.shape[1]
    transcendentals = B + sum(l[2].shape[1] for l in prep["cross"] + prep["deep"])
    bytes_accessed = sum(int(a.size) * a.dtype.itemsize for a in inputs) + R * pack * 4

    vmem_limit = int(min(max(2 * bytes_accessed + (1 << 20), 16 * 1024 * 1024),
                         64 * 1024 * 1024))

    out_packed = pl.pallas_call(
        _make_fused_kernel(num_cross, num_deep, pack, B),
        out_shape=jax.ShapeDtypeStruct((R, pack), jnp.float32),
        in_specs=in_specs,
        out_specs=vmem,
        compiler_params=pltpu.CompilerParams(vmem_limit_bytes=vmem_limit),
        cost_estimate=pl.CostEstimate(
            flops=int(flops),
            transcendentals=int(transcendentals),
            bytes_accessed=int(bytes_accessed)),
    )(*inputs)
    return out_packed.reshape(B, 1)


# ---------------------------------------------------------------------------
# Parameter construction (deterministic, mirrors the PyTorch module layout)
# ---------------------------------------------------------------------------
def make_params(key, input_dim, num_cross_layers, deep_dims, head_hidden_dim):
    params = {"cross": [], "deep": []}

    def linear(key, d_in, d_out):
        k1, k2 = jax.random.split(key)
        bound = 1.0 / jnp.sqrt(d_in)
        w = jax.random.uniform(k1, (d_in, d_out), jnp.float32, -bound, bound)
        b = jax.random.uniform(k2, (1, d_out), jnp.float32, -bound, bound)
        return w, b

    def bn(key, d):
        k1, k2 = jax.random.split(key)
        gamma = 1.0 + 0.1 * jax.random.normal(k1, (1, d), jnp.float32)
        beta = 0.1 * jax.random.normal(k2, (1, d), jnp.float32)
        return gamma, beta

    keys = jax.random.split(key, num_cross_layers + len(deep_dims) + 3)
    ki = 0
    for _ in range(num_cross_layers):
        k_lin, k_bn = jax.random.split(keys[ki]); ki += 1
        w, b = linear(k_lin, input_dim, input_dim)
        g, be = bn(k_bn, input_dim)
        params["cross"].append((w, b, g, be))

    dims = [input_dim] + list(deep_dims)
    for i in range(len(deep_dims)):
        k_lin, k_bn = jax.random.split(keys[ki]); ki += 1
        w, b = linear(k_lin, dims[i], dims[i + 1])
        g, be = bn(k_bn, dims[i + 1])
        params["deep"].append((w, b, g, be))

    w1, b1 = linear(keys[ki], input_dim + deep_dims[-1], head_hidden_dim); ki += 1
    w2, b2 = linear(keys[ki], head_hidden_dim, 1); ki += 1
    params["head"] = (w1, b1, w2, b2)
    return params


# ---------------------------------------------------------------------------
# Pure-JAX reference (un-packed) for correctness validation
# ---------------------------------------------------------------------------
def dcnv2_reference(x, params):
    def bn(h, g, b):
        m = jnp.mean(h, axis=0, keepdims=True)
        v = jnp.mean((h - m) ** 2, axis=0, keepdims=True)
        return (h - m) * jax.lax.rsqrt(v + EPS) * g + b

    x0 = x
    xc = x0
    for (w, bb, g, be) in params["cross"]:
        xc = bn(xc @ w + bb, g, be) * x0 + xc
    xd = x0
    for (w, bb, g, be) in params["deep"]:
        xd = bn(jnp.maximum(xd @ w + bb, 0.0), g, be)
    w1, b1, w2, b2 = params["head"]
    z = jnp.maximum(jnp.concatenate([xc, xd], axis=-1) @ w1 + b1, 0.0)
    return jax.nn.sigmoid(z @ w2 + b2)


# ---------------------------------------------------------------------------
if __name__ == "__main__":
    B = 8
    INPUT_DIM = 32
    NUM_CROSS_LAYERS = 3
    DEEP_HIDDEN_DIMS = [32, 16]
    HEAD_HIDDEN_DIM = 16

    key = jax.random.PRNGKey(0)
    k_x, k_p = jax.random.split(key)

    x = jax.random.normal(k_x, (B, INPUT_DIM), dtype=jnp.float32)
    params = make_params(k_p, INPUT_DIM, NUM_CROSS_LAYERS,
                         DEEP_HIDDEN_DIMS, HEAD_HIDDEN_DIM)

    pack, prep = prepare_params(params, B, INPUT_DIM)   # one-time weight prep
    out = dcnv2_forward(x, prep, pack=pack)
    out = jax.block_until_ready(out)

    assert out.shape == (B, 1), out.shape
    assert bool(jnp.all(jnp.isfinite(out)))
    assert bool(jnp.all((out >= 0.0) & (out <= 1.0)))

    ref = dcnv2_reference(x, params)
    assert bool(jnp.allclose(out, ref, atol=2e-2)), float(jnp.max(jnp.abs(out - ref)))

    print("KERNEL_OK")
</pallas_src>

<mosaic_0001>
module attributes {stable_mosaic.version = 11 : i64} {
  func.func @kernel(%arg0: memref<2x128xf32, #tpu.memory_space<vmem>>, %arg1: memref<128x128xf32, #tpu.memory_space<vmem>>, %arg2: memref<1x128xf32, #tpu.memory_space<vmem>>, %arg3: memref<1x128xf32, #tpu.memory_space<vmem>>, %arg4: memref<1x128xf32, #tpu.memory_space<vmem>>, %arg5: memref<128x128xf32, #tpu.memory_space<vmem>>, %arg6: memref<1x128xf32, #tpu.memory_space<vmem>>, %arg7: memref<1x128xf32, #tpu.memory_space<vmem>>, %arg8: memref<1x128xf32, #tpu.memory_space<vmem>>, %arg9: memref<128x128xf32, #tpu.memory_space<vmem>>, %arg10: memref<1x128xf32, #tpu.memory_space<vmem>>, %arg11: memref<1x128xf32, #tpu.memory_space<vmem>>, %arg12: memref<1x128xf32, #tpu.memory_space<vmem>>, %arg13: memref<128x128xf32, #tpu.memory_space<vmem>>, %arg14: memref<1x128xf32, #tpu.memory_space<vmem>>, %arg15: memref<1x128xf32, #tpu.memory_space<vmem>>, %arg16: memref<1x128xf32, #tpu.memory_space<vmem>>, %arg17: memref<128x64xf32, #tpu.memory_space<vmem>>, %arg18: memref<1x64xf32, #tpu.memory_space<vmem>>, %arg19: memref<1x64xf32, #tpu.memory_space<vmem>>, %arg20: memref<1x64xf32, #tpu.memory_space<vmem>>, %arg21: memref<128x64xf32, #tpu.memory_space<vmem>>, %arg22: memref<64x64xf32, #tpu.memory_space<vmem>>, %arg23: memref<1x64xf32, #tpu.memory_space<vmem>>, %arg24: memref<64x4xf32, #tpu.memory_space<vmem>>, %arg25: memref<1x1xf32, #tpu.memory_space<smem>>, %arg26: memref<2x4xf32, #tpu.memory_space<vmem>>) attributes {dimension_semantics = [], scalar_prefetch = 0 : i64, scratch_operands = 0 : i64, tpu.core_type = #tpu.core_type<tc>} {
    %c0 = arith.constant 0 : index
    %c0_0 = arith.constant 0 : index
    %0 = vector.load %arg0[%c0, %c0_0] : memref<2x128xf32, #tpu.memory_space<vmem>>, vector<2x128xf32>
    %c0_1 = arith.constant 0 : index
    %c0_2 = arith.constant 0 : index
    %1 = vector.load %arg1[%c0_1, %c0_2] : memref<128x128xf32, #tpu.memory_space<vmem>>, vector<128x128xf32>
    %cst = arith.constant dense<0.000000e+00> : vector<2x128xf32>
    %2 = tpu.matmul %0, %1, %cst {dimension_numbers = #tpu.dot_dimension_numbers<[1], [0], [0], [1], [0, 0, 1, 1], [], []>} : vector<2x128xf32>, vector<128x128xf32>, vector<2x128xf32> -> vector<2x128xf32>
    %c0_3 = arith.constant 0 : index
    %c0_4 = arith.constant 0 : index
    %3 = vector.load %arg2[%c0_3, %c0_4] : memref<1x128xf32, #tpu.memory_space<vmem>>, vector<1x128xf32>
    %4 = vector.broadcast %3 : vector<1x128xf32> to vector<2x128xf32>
    %5 = arith.addf %2, %4 : vector<2x128xf32>
    %c0_5 = arith.constant 0 : index
    %c0_6 = arith.constant 0 : index
    %6 = vector.load %arg3[%c0_5, %c0_6] : memref<1x128xf32, #tpu.memory_space<vmem>>, vector<1x128xf32>
    %c0_7 = arith.constant 0 : index
    %c0_8 = arith.constant 0 : index
    %7 = vector.load %arg4[%c0_7, %c0_8] : memref<1x128xf32, #tpu.memory_space<vmem>>, vector<1x128xf32>
    %cst_9 = arith.constant dense<0.000000e+00> : vector<128xf32>
    %8 = vector.multi_reduction <add>, %5, %cst_9 [0] : vector<2x128xf32> to vector<128xf32>
    %9 = vector.shape_cast %8 : vector<128xf32> to vector<1x128xf32>
    %10 = vector.extract_strided_slice %9 {offsets = [0, 0], sizes = [1, 32], strides = [1, 1]} : vector<1x128xf32> to vector<1x32xf32>
    %11 = vector.extract_strided_slice %9 {offsets = [0, 32], sizes = [1, 32], strides = [1, 1]} : vector<1x128xf32> to vector<1x32xf32>
    %12 = arith.addf %10, %11 : vector<1x32xf32>
    %13 = vector.extract_strided_slice %9 {offsets = [0, 64], sizes = [1, 32], strides = [1, 1]} : vector<1x128xf32> to vector<1x32xf32>
    %14 = arith.addf %12, %13 : vector<1x32xf32>
    %15 = vector.extract_strided_slice %9 {offsets = [0, 96], sizes = [1, 32], strides = [1, 1]} : vector<1x128xf32> to vector<1x32xf32>
    %16 = arith.addf %14, %15 : vector<1x32xf32>
    %17 = tpu.concatenate %16, %16, %16, %16 in 1 : vector<1x32xf32>, vector<1x32xf32>, vector<1x32xf32>, vector<1x32xf32> -> vector<1x128xf32>
    %cst_10 = arith.constant 1.250000e-01 : f32
    %18 = vector.broadcast %cst_10 : f32 to vector<1x128xf32>
    %19 = arith.mulf %17, %18 : vector<1x128xf32>
    %20 = vector.broadcast %19 : vector<1x128xf32> to vector<2x128xf32>
    %21 = arith.subf %5, %20 : vector<2x128xf32>
    %22 = arith.mulf %21, %21 : vector<2x128xf32>
    %cst_11 = arith.constant dense<0.000000e+00> : vector<128xf32>
    %23 = vector.multi_reduction <add>, %22, %cst_11 [0] : vector<2x128xf32> to vector<128xf32>
    %24 = vector.shape_cast %23 : vector<128xf32> to vector<1x128xf32>
    %25 = vector.extract_strided_slice %24 {offsets = [0, 0], sizes = [1, 32], strides = [1, 1]} : vector<1x128xf32> to vector<1x32xf32>
    %26 = vector.extract_strided_slice %24 {offsets = [0, 32], sizes = [1, 32], strides = [1, 1]} : vector<1x128xf32> to vector<1x32xf32>
    %27 = arith.addf %25, %26 : vector<1x32xf32>
    %28 = vector.extract_strided_slice %24 {offsets = [0, 64], sizes = [1, 32], strides = [1, 1]} : vector<1x128xf32> to vector<1x32xf32>
    %29 = arith.addf %27, %28 : vector<1x32xf32>
    %30 = vector.extract_strided_slice %24 {offsets = [0, 96], sizes = [1, 32], strides = [1, 1]} : vector<1x128xf32> to vector<1x32xf32>
    %31 = arith.addf %29, %30 : vector<1x32xf32>
    %32 = tpu.concatenate %31, %31, %31, %31 in 1 : vector<1x32xf32>, vector<1x32xf32>, vector<1x32xf32>, vector<1x32xf32> -> vector<1x128xf32>
    %cst_12 = arith.constant 1.250000e-01 : f32
    %33 = vector.broadcast %cst_12 : f32 to vector<1x128xf32>
    %34 = arith.mulf %32, %33 : vector<1x128xf32>
    %cst_13 = arith.constant 9.99999974E-6 : f32
    %35 = vector.broadcast %cst_13 : f32 to vector<1x128xf32>
    %36 = arith.addf %34, %35 : vector<1x128xf32>
    %37 = math.rsqrt %36 : vector<1x128xf32>
    %38 = vector.broadcast %37 : vector<1x128xf32> to vector<2x128xf32>
    %39 = arith.mulf %21, %38 : vector<2x128xf32>
    %40 = vector.broadcast %6 : vector<1x128xf32> to vector<2x128xf32>
    %41 = arith.mulf %39, %40 : vector<2x128xf32>
    %42 = vector.broadcast %7 : vector<1x128xf32> to vector<2x128xf32>
    %43 = arith.addf %41, %42 : vector<2x128xf32>
    %44 = arith.mulf %43, %0 : vector<2x128xf32>
    %45 = arith.addf %44, %0 : vector<2x128xf32>
    %c0_14 = arith.constant 0 : index
    %c0_15 = arith.constant 0 : index
    %46 = vector.load %arg5[%c0_14, %c0_15] : memref<128x128xf32, #tpu.memory_space<vmem>>, vector<128x128xf32>
    %cst_16 = arith.constant dense<0.000000e+00> : vector<2x128xf32>
    %47 = tpu.matmul %45, %46, %cst_16 {dimension_numbers = #tpu.dot_dimension_numbers<[1], [0], [0], [1], [0, 0, 1, 1], [], []>} : vector<2x128xf32>, vector<128x128xf32>, vector<2x128xf32> -> vector<2x128xf32>
    %c0_17 = arith.constant 0 : index
    %c0_18 = arith.constant 0 : index
    %48 = vector.load %arg6[%c0_17, %c0_18] : memref<1x128xf32, #tpu.memory_space<vmem>>, vector<1x128xf32>
    %49 = vector.broadcast %48 : vector<1x128xf32> to vector<2x128xf32>
    %50 = arith.addf %47, %49 : vector<2x128xf32>
    %c0_19 = arith.constant 0 : index
    %c0_20 = arith.constant 0 : index
    %51 = vector.load %arg7[%c0_19, %c0_20] : memref<1x128xf32, #tpu.memory_space<vmem>>, vector<1x128xf32>
    %c0_21 = arith.constant 0 : index
    %c0_22 = arith.constant 0 : index
    %52 = vector.load %arg8[%c0_21, %c0_22] : memref<1x128xf32, #tpu.memory_space<vmem>>, vector<1x128xf32>
    %cst_23 = arith.constant dense<0.000000e+00> : vector<128xf32>
    %53 = vector.multi_reduction <add>, %50, %cst_23 [0] : vector<2x128xf32> to vector<128xf32>
    %54 = vector.shape_cast %53 : vector<128xf32> to vector<1x128xf32>
    %55 = vector.extract_strided_slice %54 {offsets = [0, 0], sizes = [1, 32], strides = [1, 1]} : vector<1x128xf32> to vector<1x32xf32>
    %56 = vector.extract_strided_slice %54 {offsets = [0, 32], sizes = [1, 32], strides = [1, 1]} : vector<1x128xf32> to vector<1x32xf32>
    %57 = arith.addf %55, %56 : vector<1x32xf32>
    %58 = vector.extract_strided_slice %54 {offsets = [0, 64], sizes = [1, 32], strides = [1, 1]} : vector<1x128xf32> to vector<1x32xf32>
    %59 = arith.addf %57, %58 : vector<1x32xf32>
    %60 = vector.extract_strided_slice %54 {offsets = [0, 96], sizes = [1, 32], strides = [1, 1]} : vector<1x128xf32> to vector<1x32xf32>
    %61 = arith.addf %59, %60 : vector<1x32xf32>
    %62 = tpu.concatenate %61, %61, %61, %61 in 1 : vector<1x32xf32>, vector<1x32xf32>, vector<1x32xf32>, vector<1x32xf32> -> vector<1x128xf32>
    %cst_24 = arith.constant 1.250000e-01 : f32
    %63 = vector.broadcast %cst_24 : f32 to vector<1x128xf32>
    %64 = arith.mulf %62, %63 : vector<1x128xf32>
    %65 = vector.broadcast %64 : vector<1x128xf32> to vector<2x128xf32>
    %66 = arith.subf %50, %65 : vector<2x128xf32>
    %67 = arith.mulf %66, %66 : vector<2x128xf32>
    %cst_25 = arith.constant dense<0.000000e+00> : vector<128xf32>
    %68 = vector.multi_reduction <add>, %67, %cst_25 [0] : vector<2x128xf32> to vector<128xf32>
    %69 = vector.shape_cast %68 : vector<128xf32> to vector<1x128xf32>
    %70 = vector.extract_strided_slice %69 {offsets = [0, 0], sizes = [1, 32], strides = [1, 1]} : vector<1x128xf32> to vector<1x32xf32>
    %71 = vector.extract_strided_slice %69 {offsets = [0, 32], sizes = [1, 32], strides = [1, 1]} : vector<1x128xf32> to vector<1x32xf32>
    %72 = arith.addf %70, %71 : vector<1x32xf32>
    %73 = vector.extract_strided_slice %69 {offsets = [0, 64], sizes = [1, 32], strides = [1, 1]} : vector<1x128xf32> to vector<1x32xf32>
    %74 = arith.addf %72, %73 : vector<1x32xf32>
    %75 = vector.extract_strided_slice %69 {offsets = [0, 96], sizes = [1, 32], strides = [1, 1]} : vector<1x128xf32> to vector<1x32xf32>
    %76 = arith.addf %74, %75 : vector<1x32xf32>
    %77 = tpu.concatenate %76, %76, %76, %76 in 1 : vector<1x32xf32>, vector<1x32xf32>, vector<1x32xf32>, vector<1x32xf32> -> vector<1x128xf32>
    %cst_26 = arith.constant 1.250000e-01 : f32
    %78 = vector.broadcast %cst_26 : f32 to vector<1x128xf32>
    %79 = arith.mulf %77, %78 : vector<1x128xf32>
    %cst_27 = arith.constant 9.99999974E-6 : f32
    %80 = vector.broadcast %cst_27 : f32 to vector<1x128xf32>
    %81 = arith.addf %79, %80 : vector<1x128xf32>
    %82 = math.rsqrt %81 : vector<1x128xf32>
    %83 = vector.broadcast %82 : vector<1x128xf32> to vector<2x128xf32>
    %84 = arith.mulf %66, %83 : vector<2x128xf32>
    %85 = vector.broadcast %51 : vector<1x128xf32> to vector<2x128xf32>
    %86 = arith.mulf %84, %85 : vector<2x128xf32>
    %87 = vector.broadcast %52 : vector<1x128xf32> to vector<2x128xf32>
    %88 = arith.addf %86, %87 : vector<2x128xf32>
    %89 = arith.mulf %88, %0 : vector<2x128xf32>
    %90 = arith.addf %89, %45 : vector<2x128xf32>
    %c0_28 = arith.constant 0 : index
    %c0_29 = arith.constant 0 : index
    %91 = vector.load %arg9[%c0_28, %c0_29] : memref<128x128xf32, #tpu.memory_space<vmem>>, vector<128x128xf32>
    %cst_30 = arith.constant dense<0.000000e+00> : vector<2x128xf32>
    %92 = tpu.matmul %90, %91, %cst_30 {dimension_numbers = #tpu.dot_dimension_numbers<[1], [0], [0], [1], [0, 0, 1, 1], [], []>} : vector<2x128xf32>, vector<128x128xf32>, vector<2x128xf32> -> vector<2x128xf32>
    %c0_31 = arith.constant 0 : index
    %c0_32 = arith.constant 0 : index
    %93 = vector.load %arg10[%c0_31, %c0_32] : memref<1x128xf32, #tpu.memory_space<vmem>>, vector<1x128xf32>
    %94 = vector.broadcast %93 : vector<1x128xf32> to vector<2x128xf32>
    %95 = arith.addf %92, %94 : vector<2x128xf32>
    %c0_33 = arith.constant 0 : index
    %c0_34 = arith.constant 0 : index
    %96 = vector.load %arg11[%c0_33, %c0_34] : memref<1x128xf32, #tpu.memory_space<vmem>>, vector<1x128xf32>
    %c0_35 = arith.constant 0 : index
    %c0_36 = arith.constant 0 : index
    %97 = vector.load %arg12[%c0_35, %c0_36] : memref<1x128xf32, #tpu.memory_space<vmem>>, vector<1x128xf32>
    %cst_37 = arith.constant dense<0.000000e+00> : vector<128xf32>
    %98 = vector.multi_reduction <add>, %95, %cst_37 [0] : vector<2x128xf32> to vector<128xf32>
    %99 = vector.shape_cast %98 : vector<128xf32> to vector<1x128xf32>
    %100 = vector.extract_strided_slice %99 {offsets = [0, 0], sizes = [1, 32], strides = [1, 1]} : vector<1x128xf32> to vector<1x32xf32>
    %101 = vector.extract_strided_slice %99 {offsets = [0, 32], sizes = [1, 32], strides = [1, 1]} : vector<1x128xf32> to vector<1x32xf32>
    %102 = arith.addf %100, %101 : vector<1x32xf32>
    %103 = vector.extract_strided_slice %99 {offsets = [0, 64], sizes = [1, 32], strides = [1, 1]} : vector<1x128xf32> to vector<1x32xf32>
    %104 = arith.addf %102, %103 : vector<1x32xf32>
    %105 = vector.extract_strided_slice %99 {offsets = [0, 96], sizes = [1, 32], strides = [1, 1]} : vector<1x128xf32> to vector<1x32xf32>
    %106 = arith.addf %104, %105 : vector<1x32xf32>
    %107 = tpu.concatenate %106, %106, %106, %106 in 1 : vector<1x32xf32>, vector<1x32xf32>, vector<1x32xf32>, vector<1x32xf32> -> vector<1x128xf32>
    %cst_38 = arith.constant 1.250000e-01 : f32
    %108 = vector.broadcast %cst_38 : f32 to vector<1x128xf32>
    %109 = arith.mulf %107, %108 : vector<1x128xf32>
    %110 = vector.broadcast %109 : vector<1x128xf32> to vector<2x128xf32>
    %111 = arith.subf %95, %110 : vector<2x128xf32>
    %112 = arith.mulf %111, %111 : vector<2x128xf32>
    %cst_39 = arith.constant dense<0.000000e+00> : vector<128xf32>
    %113 = vector.multi_reduction <add>, %112, %cst_39 [0] : vector<2x128xf32> to vector<128xf32>
    %114 = vector.shape_cast %113 : vector<128xf32> to vector<1x128xf32>
    %115 = vector.extract_strided_slice %114 {offsets = [0, 0], sizes = [1, 32], strides = [1, 1]} : vector<1x128xf32> to vector<1x32xf32>
    %116 = vector.extract_strided_slice %114 {offsets = [0, 32], sizes = [1, 32], strides = [1, 1]} : vector<1x128xf32> to vector<1x32xf32>
    %117 = arith.addf %115, %116 : vector<1x32xf32>
    %118 = vector.extract_strided_slice %114 {offsets = [0, 64], sizes = [1, 32], strides = [1, 1]} : vector<1x128xf32> to vector<1x32xf32>
    %119 = arith.addf %117, %118 : vector<1x32xf32>
    %120 = vector.extract_strided_slice %114 {offsets = [0, 96], sizes = [1, 32], strides = [1, 1]} : vector<1x128xf32> to vector<1x32xf32>
    %121 = arith.addf %119, %120 : vector<1x32xf32>
    %122 = tpu.concatenate %121, %121, %121, %121 in 1 : vector<1x32xf32>, vector<1x32xf32>, vector<1x32xf32>, vector<1x32xf32> -> vector<1x128xf32>
    %cst_40 = arith.constant 1.250000e-01 : f32
    %123 = vector.broadcast %cst_40 : f32 to vector<1x128xf32>
    %124 = arith.mulf %122, %123 : vector<1x128xf32>
    %cst_41 = arith.constant 9.99999974E-6 : f32
    %125 = vector.broadcast %cst_41 : f32 to vector<1x128xf32>
    %126 = arith.addf %124, %125 : vector<1x128xf32>
    %127 = math.rsqrt %126 : vector<1x128xf32>
    %128 = vector.broadcast %127 : vector<1x128xf32> to vector<2x128xf32>
    %129 = arith.mulf %111, %128 : vector<2x128xf32>
    %130 = vector.broadcast %96 : vector<1x128xf32> to vector<2x128xf32>
    %131 = arith.mulf %129, %130 : vector<2x128xf32>
    %132 = vector.broadcast %97 : vector<1x128xf32> to vector<2x128xf32>
    %133 = arith.addf %131, %132 : vector<2x128xf32>
    %134 = arith.mulf %133, %0 : vector<2x128xf32>
    %135 = arith.addf %134, %90 : vector<2x128xf32>
    %c0_42 = arith.constant 0 : index
    %c0_43 = arith.constant 0 : index
    %136 = vector.load %arg13[%c0_42, %c0_43] : memref<128x128xf32, #tpu.memory_space<vmem>>, vector<128x128xf32>
    %cst_44 = arith.constant dense<0.000000e+00> : vector<2x128xf32>
    %137 = tpu.matmul %0, %136, %cst_44 {dimension_numbers = #tpu.dot_dimension_numbers<[1], [0], [0], [1], [0, 0, 1, 1], [], []>} : vector<2x128xf32>, vector<128x128xf32>, vector<2x128xf32> -> vector<2x128xf32>
    %c0_45 = arith.constant 0 : index
    %c0_46 = arith.constant 0 : index
    %138 = vector.load %arg14[%c0_45, %c0_46] : memref<1x128xf32, #tpu.memory_space<vmem>>, vector<1x128xf32>
    %139 = vector.broadcast %138 : vector<1x128xf32> to vector<2x128xf32>
    %140 = arith.addf %137, %139 : vector<2x128xf32>
    %cst_47 = arith.constant 0.000000e+00 : f32
    %141 = vector.broadcast %cst_47 : f32 to vector<2x128xf32>
    %142 = arith.maximumf %140, %141 : vector<2x128xf32>
    %c0_48 = arith.constant 0 : index
    %c0_49 = arith.constant 0 : index
    %143 = vector.load %arg15[%c0_48, %c0_49] : memref<1x128xf32, #tpu.memory_space<vmem>>, vector<1x128xf32>
    %c0_50 = arith.constant 0 : index
    %c0_51 = arith.constant 0 : index
    %144 = vector.load %arg16[%c0_50, %c0_51] : memref<1x128xf32, #tpu.memory_space<vmem>>, vector<1x128xf32>
    %cst_52 = arith.constant dense<0.000000e+00> : vector<128xf32>
    %145 = vector.multi_reduction <add>, %142, %cst_52 [0] : vector<2x128xf32> to vector<128xf32>
    %146 = vector.shape_cast %145 : vector<128xf32> to vector<1x128xf32>
    %147 = vector.extract_strided_slice %146 {offsets = [0, 0], sizes = [1, 32], strides = [1, 1]} : vector<1x128xf32> to vector<1x32xf32>
    %148 = vector.extract_strided_slice %146 {offsets = [0, 32], sizes = [1, 32], strides = [1, 1]} : vector<1x128xf32> to vector<1x32xf32>
    %149 = arith.addf %147, %148 : vector<1x32xf32>
    %150 = vector.extract_strided_slice %146 {offsets = [0, 64], sizes = [1, 32], strides = [1, 1]} : vector<1x128xf32> to vector<1x32xf32>
    %151 = arith.addf %149, %150 : vector<1x32xf32>
    %152 = vector.extract_strided_slice %146 {offsets = [0, 96], sizes = [1, 32], strides = [1, 1]} : vector<1x128xf32> to vector<1x32xf32>
    %153 = arith.addf %151, %152 : vector<1x32xf32>
    %154 = tpu.concatenate %153, %153, %153, %153 in 1 : vector<1x32xf32>, vector<1x32xf32>, vector<1x32xf32>, vector<1x32xf32> -> vector<1x128xf32>
    %cst_53 = arith.constant 1.250000e-01 : f32
    %155 = vector.broadcast %cst_53 : f32 to vector<1x128xf32>
    %156 = arith.mulf %154, %155 : vector<1x128xf32>
    %157 = vector.broadcast %156 : vector<1x128xf32> to vector<2x128xf32>
    %158 = arith.subf %142, %157 : vector<2x128xf32>
    %159 = arith.mulf %158, %158 : vector<2x128xf32>
    %cst_54 = arith.constant dense<0.000000e+00> : vector<128xf32>
    %160 = vector.multi_reduction <add>, %159, %cst_54 [0] : vector<2x128xf32> to vector<128xf32>
    %161 = vector.shape_cast %160 : vector<128xf32> to vector<1x128xf32>
    %162 = vector.extract_strided_slice %161 {offsets = [0, 0], sizes = [1, 32], strides = [1, 1]} : vector<1x128xf32> to vector<1x32xf32>
    %163 = vector.extract_strided_slice %161 {offsets = [0, 32], sizes = [1, 32], strides = [1, 1]} : vector<1x128xf32> to vector<1x32xf32>
    %164 = arith.addf %162, %163 : vector<1x32xf32>
    %165 = vector.extract_strided_slice %161 {offsets = [0, 64], sizes = [1, 32], strides = [1, 1]} : vector<1x128xf32> to vector<1x32xf32>
    %166 = arith.addf %164, %165 : vector<1x32xf32>
    %167 = vector.extract_strided_slice %161 {offsets = [0, 96], sizes = [1, 32], strides = [1, 1]} : vector<1x128xf32> to vector<1x32xf32>
    %168 = arith.addf %166, %167 : vector<1x32xf32>
    %169 = tpu.concatenate %168, %168, %168, %168 in 1 : vector<1x32xf32>, vector<1x32xf32>, vector<1x32xf32>, vector<1x32xf32> -> vector<1x128xf32>
    %cst_55 = arith.constant 1.250000e-01 : f32
    %170 = vector.broadcast %cst_55 : f32 to vector<1x128xf32>
    %171 = arith.mulf %169, %170 : vector<1x128xf32>
    %cst_56 = arith.constant 9.99999974E-6 : f32
    %172 = vector.broadcast %cst_56 : f32 to vector<1x128xf32>
    %173 = arith.addf %171, %172 : vector<1x128xf32>
    %174 = math.rsqrt %173 : vector<1x128xf32>
    %175 = vector.broadcast %174 : vector<1x128xf32> to vector<2x128xf32>
    %176 = arith.mulf %158, %175 : vector<2x128xf32>
    %177 = vector.broadcast %143 : vector<1x128xf32> to vector<2x128xf32>
    %178 = arith.mulf %176, %177 : vector<2x128xf32>
    %179 = vector.broadcast %144 : vector<1x128xf32> to vector<2x128xf32>
    %180 = arith.addf %178, %179 : vector<2x128xf32>
    %c0_57 = arith.constant 0 : index
    %c0_58 = arith.constant 0 : index
    %181 = vector.load %arg17[%c0_57, %c0_58] : memref<128x64xf32, #tpu.memory_space<vmem>>, vector<128x64xf32>
    %cst_59 = arith.constant dense<0.000000e+00> : vector<2x64xf32>
    %182 = tpu.matmul %180, %181, %cst_59 {dimension_numbers = #tpu.dot_dimension_numbers<[1], [0], [0], [1], [0, 0, 1, 1], [], []>} : vector<2x128xf32>, vector<128x64xf32>, vector<2x64xf32> -> vector<2x64xf32>
    %c0_60 = arith.constant 0 : index
    %c0_61 = arith.constant 0 : index
    %183 = vector.load %arg18[%c0_60, %c0_61] : memref<1x64xf32, #tpu.memory_space<vmem>>, vector<1x64xf32>
    %184 = vector.broadcast %183 : vector<1x64xf32> to vector<2x64xf32>
    %185 = arith.addf %182, %184 : vector<2x64xf32>
    %cst_62 = arith.constant 0.000000e+00 : f32
    %186 = vector.broadcast %cst_62 : f32 to vector<2x64xf32>
    %187 = arith.maximumf %185, %186 : vector<2x64xf32>
    %c0_63 = arith.constant 0 : index
    %c0_64 = arith.constant 0 : index
    %188 = vector.load %arg19[%c0_63, %c0_64] : memref<1x64xf32, #tpu.memory_space<vmem>>, vector<1x64xf32>
    %c0_65 = arith.constant 0 : index
    %c0_66 = arith.constant 0 : index
    %189 = vector.load %arg20[%c0_65, %c0_66] : memref<1x64xf32, #tpu.memory_space<vmem>>, vector<1x64xf32>
    %cst_67 = arith.constant dense<0.000000e+00> : vector<64xf32>
    %190 = vector.multi_reduction <add>, %187, %cst_67 [0] : vector<2x64xf32> to vector<64xf32>
    %191 = vector.shape_cast %190 : vector<64xf32> to vector<1x64xf32>
    %192 = vector.extract_strided_slice %191 {offsets = [0, 0], sizes = [1, 16], strides = [1, 1]} : vector<1x64xf32> to vector<1x16xf32>
    %193 = vector.extract_strided_slice %191 {offsets = [0, 16], sizes = [1, 16], strides = [1, 1]} : vector<1x64xf32> to vector<1x16xf32>
    %194 = arith.addf %192, %193 : vector<1x16xf32>
    %195 = vector.extract_strided_slice %191 {offsets = [0, 32], sizes = [1, 16], strides = [1, 1]} : vector<1x64xf32> to vector<1x16xf32>
    %196 = arith.addf %194, %195 : vector<1x16xf32>
    %197 = vector.extract_strided_slice %191 {offsets = [0, 48], sizes = [1, 16], strides = [1, 1]} : vector<1x64xf32> to vector<1x16xf32>
    %198 = arith.addf %196, %197 : vector<1x16xf32>
    %199 = tpu.concatenate %198, %198, %198, %198 in 1 : vector<1x16xf32>, vector<1x16xf32>, vector<1x16xf32>, vector<1x16xf32> -> vector<1x64xf32>
    %cst_68 = arith.constant 1.250000e-01 : f32
    %200 = vector.broadcast %cst_68 : f32 to vector<1x64xf32>
    %201 = arith.mulf %199, %200 : vector<1x64xf32>
    %202 = vector.broadcast %201 : vector<1x64xf32> to vector<2x64xf32>
    %203 = arith.subf %187, %202 : vector<2x64xf32>
    %204 = arith.mulf %203, %203 : vector<2x64xf32>
    %cst_69 = arith.constant dense<0.000000e+00> : vector<64xf32>
    %205 = vector.multi_reduction <add>, %204, %cst_69 [0] : vector<2x64xf32> to vector<64xf32>
    %206 = vector.shape_cast %205 : vector<64xf32> to vector<1x64xf32>
    %207 = vector.extract_strided_slice %206 {offsets = [0, 0], sizes = [1, 16], strides = [1, 1]} : vector<1x64xf32> to vector<1x16xf32>
    %208 = vector.extract_strided_slice %206 {offsets = [0, 16], sizes = [1, 16], strides = [1, 1]} : vector<1x64xf32> to vector<1x16xf32>
    %209 = arith.addf %207, %208 : vector<1x16xf32>
    %210 = vector.extract_strided_slice %206 {offsets = [0, 32], sizes = [1, 16], strides = [1, 1]} : vector<1x64xf32> to vector<1x16xf32>
    %211 = arith.addf %209, %210 : vector<1x16xf32>
    %212 = vector.extract_strided_slice %206 {offsets = [0, 48], sizes = [1, 16], strides = [1, 1]} : vector<1x64xf32> to vector<1x16xf32>
    %213 = arith.addf %211, %212 : vector<1x16xf32>
    %214 = tpu.concatenate %213, %213, %213, %213 in 1 : vector<1x16xf32>, vector<1x16xf32>, vector<1x16xf32>, vector<1x16xf32> -> vector<1x64xf32>
    %cst_70 = arith.constant 1.250000e-01 : f32
    %215 = vector.broadcast %cst_70 : f32 to vector<1x64xf32>
    %216 = arith.mulf %214, %215 : vector<1x64xf32>
    %cst_71 = arith.constant 9.99999974E-6 : f32
    %217 = vector.broadcast %cst_71 : f32 to vector<1x64xf32>
    %218 = arith.addf %216, %217 : vector<1x64xf32>
    %219 = math.rsqrt %218 : vector<1x64xf32>
    %220 = vector.broadcast %219 : vector<1x64xf32> to vector<2x64xf32>
    %221 = arith.mulf %203, %220 : vector<2x64xf32>
    %222 = vector.broadcast %188 : vector<1x64xf32> to vector<2x64xf32>
    %223 = arith.mulf %221, %222 : vector<2x64xf32>
    %224 = vector.broadcast %189 : vector<1x64xf32> to vector<2x64xf32>
    %225 = arith.addf %223, %224 : vector<2x64xf32>
    %c0_72 = arith.constant 0 : index
    %c0_73 = arith.constant 0 : index
    %226 = vector.load %arg21[%c0_72, %c0_73] : memref<128x64xf32, #tpu.memory_space<vmem>>, vector<128x64xf32>
    %cst_74 = arith.constant dense<0.000000e+00> : vector<2x64xf32>
    %227 = tpu.matmul %135, %226, %cst_74 {dimension_numbers = #tpu.dot_dimension_numbers<[1], [0], [0], [1], [0, 0, 1, 1], [], []>} : vector<2x128xf32>, vector<128x64xf32>, vector<2x64xf32> -> vector<2x64xf32>
    %c0_75 = arith.constant 0 : index
    %c0_76 = arith.constant 0 : index
    %228 = vector.load %arg22[%c0_75, %c0_76] : memref<64x64xf32, #tpu.memory_space<vmem>>, vector<64x64xf32>
    %cst_77 = arith.constant dense<0.000000e+00> : vector<2x64xf32>
    %229 = tpu.matmul %225, %228, %cst_77 {dimension_numbers = #tpu.dot_dimension_numbers<[1], [0], [0], [1], [0, 0, 1, 1], [], []>} : vector<2x64xf32>, vector<64x64xf32>, vector<2x64xf32> -> vector<2x64xf32>
    %230 = arith.addf %227, %229 : vector<2x64xf32>
    %c0_78 = arith.constant 0 : index
    %c0_79 = arith.constant 0 : index
    %231 = vector.load %arg23[%c0_78, %c0_79] : memref<1x64xf32, #tpu.memory_space<vmem>>, vector<1x64xf32>
    %232 = vector.broadcast %231 : vector<1x64xf32> to vector<2x64xf32>
    %233 = arith.addf %230, %232 : vector<2x64xf32>
    %cst_80 = arith.constant 0.000000e+00 : f32
    %234 = vector.broadcast %cst_80 : f32 to vector<2x64xf32>
    %235 = arith.maximumf %233, %234 : vector<2x64xf32>
    %c0_81 = arith.constant 0 : index
    %c0_82 = arith.constant 0 : index
    %236 = vector.load %arg24[%c0_81, %c0_82] : memref<64x4xf32, #tpu.memory_space<vmem>>, vector<64x4xf32>
    %cst_83 = arith.constant dense<0.000000e+00> : vector<2x4xf32>
    %237 = tpu.matmul %235, %236, %cst_83 {dimension_numbers = #tpu.dot_dimension_numbers<[1], [0], [0], [1], [0, 0, 1, 1], [], []>} : vector<2x64xf32>, vector<64x4xf32>, vector<2x4xf32> -> vector<2x4xf32>
    %c0_84 = arith.constant 0 : index
    %c0_85 = arith.constant 0 : index
    %238 = memref.load %arg25[%c0_84, %c0_85] : memref<1x1xf32, #tpu.memory_space<smem>>
    %239 = vector.broadcast %238 : f32 to vector<2x4xf32>
    %240 = arith.addf %237, %239 : vector<2x4xf32>
    %241 = arith.negf %240 : vector<2x4xf32>
    %242 = math.exp %241 : vector<2x4xf32>
    %cst_86 = arith.constant 1.000000e+00 : f32
    %243 = vector.broadcast %cst_86 : f32 to vector<2x4xf32>
    %244 = arith.addf %243, %242 : vector<2x4xf32>
    %245 = arith.divf %243, %244 : vector<2x4xf32>
    %c0_87 = arith.constant 0 : index
    %c0_88 = arith.constant 0 : index
    %246 = vector.load %arg26[%c0_87, %c0_88] : memref<2x4xf32, #tpu.memory_space<vmem>>, vector<2x4xf32>
    tpu.vector_store %arg26[%c0_87, %c0_88], %245 {strides = array<i32>} : memref<2x4xf32, #tpu.memory_space<vmem>>, vector<2x4xf32>,
    return
  }
}

</mosaic_0001>

<llo_original>
// kernel: dcnv2_forward.1
$region0: #{dcnv2_forward.1}
  #allocation0 [shape = 'u32[]', space=smem, size = 0x4, offset = 0x4, fixed_abs, tag = 'smem constant byte address 0x4 - core index']
  #allocation1 [shape = 'u32[72,128]{1,0:T(1,128)}', space=vmem, size = 0x9000, scoped, tag = 'internal scratch']
  #allocation2 [shape = 'f32[1,1]{1,0:T(1,128)S(6)}', space=smem, size = 0x200, scoped, tag = 'scoped memory for dcnv2_forward.1']
  %s0 = inlined_call_operand.vmem [shape: f32[2,128], index: 0, kind: input, shape index: {}]
  %s1 = inlined_call_operand.vmem [shape: f32[128,128], index: 1, kind: input, shape index: {}]
  %s2 = inlined_call_operand.vmem [shape: f32[1,128], index: 2, kind: input, shape index: {}]
  %s3 = inlined_call_operand.vmem [shape: f32[1,128], index: 3, kind: input, shape index: {}]
  %s4 = inlined_call_operand.vmem [shape: f32[1,128], index: 4, kind: input, shape index: {}]
  %s5 = inlined_call_operand.vmem [shape: f32[128,128], index: 5, kind: input, shape index: {}]
  %s6 = inlined_call_operand.vmem [shape: f32[1,128], index: 6, kind: input, shape index: {}]
  %s7 = inlined_call_operand.vmem [shape: f32[1,128], index: 7, kind: input, shape index: {}]
  %s8 = inlined_call_operand.vmem [shape: f32[1,128], index: 8, kind: input, shape index: {}]
  %s9 = inlined_call_operand.vmem [shape: f32[128,128], index: 9, kind: input, shape index: {}]
  %s10 = inlined_call_operand.vmem [shape: f32[1,128], index: 10, kind: input, shape index: {}]
  %s11 = inlined_call_operand.vmem [shape: f32[1,128], index: 11, kind: input, shape index: {}]
  %s12 = inlined_call_operand.vmem [shape: f32[1,128], index: 12, kind: input, shape index: {}]
  %s13 = inlined_call_operand.hbm [shape: f32[128,128], index: 13, kind: input, shape index: {}]
  %s14 = inlined_call_operand.vmem [shape: f32[1,128], index: 14, kind: input, shape index: {}]
  %s15 = inlined_call_operand.vmem [shape: f32[1,128], index: 15, kind: input, shape index: {}]
  %s16 = inlined_call_operand.vmem [shape: f32[1,128], index: 16, kind: input, shape index: {}]
  %s17 = inlined_call_operand.vmem [shape: f32[128,64], index: 17, kind: input, shape index: {}]
  %s18 = inlined_call_operand.vmem [shape: f32[1,64], index: 18, kind: input, shape index: {}]
  %s19 = inlined_call_operand.vmem [shape: f32[1,64], index: 19, kind: input, shape index: {}]
  %s20 = inlined_call_operand.vmem [shape: f32[1,64], index: 20, kind: input, shape index: {}]
  %s21 = inlined_call_operand.vmem [shape: f32[128,64], index: 21, kind: input, shape index: {}]
  %s22 = inlined_call_operand.vmem [shape: f32[64,64], index: 22, kind: input, shape index: {}]
  %s23 = inlined_call_operand.vmem [shape: f32[1,64], index: 23, kind: input, shape index: {}]
  %s24 = inlined_call_operand.vmem [shape: f32[64,4], index: 24, kind: input, shape index: {}]
  %s25 = inlined_call_operand.<no memory space> [shape: f32[1,1], index: 25, kind: input, shape index: {}]
  %s26 = inlined_call_operand.vmem [shape: f32[2,4], index: 26, kind: output, shape index: {}]
  %s27 = sld [smem:[#allocation0]]
  $region118: #{dcnv2_forward.1} parent=0
    _
  %s29 = ssub.s32 1, %s27
  %s30 = scalar_select 0, %s29, %s27
  %31 = sst [smem:[#allocation2]] %s25
  $region1: #{dcnv2_forward.1} parent=0
    #allocation3 [shape = 'u8[65536]{0}', space=vmem, size = 0x10000, scoped, tag = 'input window, operand 13, single buffered']
    #allocation4 [shape = 's32[1]{0}', space=sflag, size = 0x4, scoped, tag = 'scoped memory for dcnv2_forward.1']
    %32 = vsyncpa [#allocation4], 0
    // Predicated region
    $region2: #{dcnv2_forward.1} parent=1 // pred_check
      _
    $region3: #{dcnv2_forward.1} parent=1 // pred_check_branch
      %34 = sbr.rel (0) target = $region5
    $region4: #{dcnv2_forward.1} parent=1 // pred_region
      _
    $region5: #{dcnv2_forward.1} parent=1 // pred_fallthru
      _
    // Predicated region
    $region6: #{dcnv2_forward.1} parent=1 // pred_check
      _
    $region7: #{dcnv2_forward.1} parent=1 // pred_check_branch
      %36 = sbr.rel (0) target = $region9
    $region8: #{dcnv2_forward.1} parent=1 // pred_region
      _
    $region9: #{dcnv2_forward.1} parent=1 // pred_fallthru
      _
    // Predicated region
    $region10: #{dcnv2_forward.1} parent=1 // pred_check
      _
    $region11: #{dcnv2_forward.1} parent=1 // pred_check_branch
      %38 = sbr.rel (0) target = $region13
    $region12: #{dcnv2_forward.1} parent=1 // pred_region
      _
    $region13: #{dcnv2_forward.1} parent=1 // pred_fallthru
      _
    // Predicated region
    $region14: #{dcnv2_forward.1} parent=1 // pred_check
      _
    $region15: #{dcnv2_forward.1} parent=1 // pred_check_branch
      %40 = sbr.rel (0) target = $region17
    $region16: #{dcnv2_forward.1} parent=1 // pred_region
      _
    $region17: #{dcnv2_forward.1} parent=1 // pred_fallthru
      _
    // Predicated region
    $region18: #{dcnv2_forward.1} parent=1 // pred_check
      _
    $region19: #{dcnv2_forward.1} parent=1 // pred_check_branch
      %42 = sbr.rel (0) target = $region21
    $region20: #{dcnv2_forward.1} parent=1 // pred_region
      _
    $region21: #{dcnv2_forward.1} parent=1 // pred_fallthru
      _
    // Predicated region
    $region22: #{dcnv2_forward.1} parent=1 // pred_check
      _
    $region23: #{dcnv2_forward.1} parent=1 // pred_check_branch
      %44 = sbr.rel (0) target = $region25
    $region24: #{dcnv2_forward.1} parent=1 // pred_region
      _
    $region25: #{dcnv2_forward.1} parent=1 // pred_fallthru
      _
    // Predicated region
    $region26: #{dcnv2_forward.1} parent=1 // pred_check
      _
    $region27: #{dcnv2_forward.1} parent=1 // pred_check_branch
      %46 = sbr.rel (0) target = $region29
    $region28: #{dcnv2_forward.1} parent=1 // pred_region
      _
    $region29: #{dcnv2_forward.1} parent=1 // pred_fallthru
      _
    // Predicated region
    $region30: #{dcnv2_forward.1} parent=1 // pred_check
      _
    $region31: #{dcnv2_forward.1} parent=1 // pred_check_branch
      %48 = sbr.rel (0) target = $region33
    $region32: #{dcnv2_forward.1} parent=1 // pred_region
      _
    $region33: #{dcnv2_forward.1} parent=1 // pred_fallthru
      _
    // Predicated region
    $region34: #{dcnv2_forward.1} parent=1 // pred_check
      _
    $region35: #{dcnv2_forward.1} parent=1 // pred_check_branch
      %50 = sbr.rel (0) target = $region37
    $region36: #{dcnv2_forward.1} parent=1 // pred_region
      _
    $region37: #{dcnv2_forward.1} parent=1 // pred_fallthru
      _
    // Predicated region
    $region38: #{dcnv2_forward.1} parent=1 // pred_check
      _
    $region39: #{dcnv2_forward.1} parent=1 // pred_check_branch
      %52 = sbr.rel (0) target = $region41
    $region40: #{dcnv2_forward.1} parent=1 // pred_region
      _
    $region41: #{dcnv2_forward.1} parent=1 // pred_fallthru
      _
    // Predicated region
    $region42: #{dcnv2_forward.1} parent=1 // pred_check
      _
    $region43: #{dcnv2_forward.1} parent=1 // pred_check_branch
      %54 = sbr.rel (0) target = $region45
    $region44: #{dcnv2_forward.1} parent=1 // pred_region
      _
    $region45: #{dcnv2_forward.1} parent=1 // pred_fallthru
      _
    // Predicated region
    $region46: #{dcnv2_forward.1} parent=1 // pred_check
      _
    $region47: #{dcnv2_forward.1} parent=1 // pred_check_branch
      %56 = sbr.rel (0) target = $region49
    $region48: #{dcnv2_forward.1} parent=1 // pred_region
      _
    $region49: #{dcnv2_forward.1} parent=1 // pred_fallthru
      _
    // Predicated region
    $region50: #{dcnv2_forward.1} parent=1 // pred_check
      _
    $region51: #{dcnv2_forward.1} parent=1 // pred_check_branch
      %58 = sbr.rel (0) target = $region53
    $region52: #{dcnv2_forward.1} parent=1 // pred_region
      _
    $region53: #{dcnv2_forward.1} parent=1 // pred_fallthru
      _
    // Predicated region
    $region54: #{dcnv2_forward.1} parent=1 // pred_check
      _
    $region55: #{dcnv2_forward.1} parent=1 // pred_check_branch
      %60 = sbr.rel (0) target = $region57
    $region56: #{dcnv2_forward.1} parent=1 // pred_region
      %62 = vsyncadd [#allocation4], 0
      %s63 = sshll.u32 %s13, 4
      %s64 = int_to_ptr.hbm [resolvable:$true] %s63
      %s65 = sshll.u32 [#allocation3], 4
      %s66 = int_to_ptr.vmem [resolvable:$true] %s65
      %71 = dma.hbm_to_vmem [thread:$0]  %s64, 2048, %s66, [#allocation4], 128, 128, 8
    $region57: #{dcnv2_forward.1} parent=1 // pred_fallthru
      _
    // Predicated region
    $region58: #{dcnv2_forward.1} parent=1 // pred_check
      _
    $region59: #{dcnv2_forward.1} parent=1 // pred_check_branch
      %73 = sbr.rel (0) target = $region61
    $region60: #{dcnv2_forward.1} parent=1 // pred_region
      _
    $region61: #{dcnv2_forward.1} parent=1 // pred_fallthru
      _
    // Predicated region
    $region62: #{dcnv2_forward.1} parent=1 // pred_check
      _
    $region63: #{dcnv2_forward.1} parent=1 // pred_check_branch
      %75 = sbr.rel (0) target = $region65
    $region64: #{dcnv2_forward.1} parent=1 // pred_region
      _
    $region65: #{dcnv2_forward.1} parent=1 // pred_fallthru
      _
    // Predicated region
    $region66: #{dcnv2_forward.1} parent=1 // pred_check
      _
    $region67: #{dcnv2_forward.1} parent=1 // pred_check_branch
      %77 = sbr.rel (0) target = $region69
    $region68: #{dcnv2_forward.1} parent=1 // pred_region
      _
    $region69: #{dcnv2_forward.1} parent=1 // pred_fallthru
      _
    // Predicated region
    $region70: #{dcnv2_forward.1} parent=1 // pred_check
      _
    $region71: #{dcnv2_forward.1} parent=1 // pred_check_branch
      %79 = sbr.rel (0) target = $region73
    $region72: #{dcnv2_forward.1} parent=1 // pred_region
      _
    $region73: #{dcnv2_forward.1} parent=1 // pred_fallthru
      _
    // Predicated region
    $region74: #{dcnv2_forward.1} parent=1 // pred_check
      _
    $region75: #{dcnv2_forward.1} parent=1 // pred_check_branch
      %81 = sbr.rel (0) target = $region77
    $region76: #{dcnv2_forward.1} parent=1 // pred_region
      _
    $region77: #{dcnv2_forward.1} parent=1 // pred_fallthru
      _
    // Predicated region
    $region78: #{dcnv2_forward.1} parent=1 // pred_check
      _
    $region79: #{dcnv2_forward.1} parent=1 // pred_check_branch
      %83 = sbr.rel (0) target = $region81
    $region80: #{dcnv2_forward.1} parent=1 // pred_region
      _
    $region81: #{dcnv2_forward.1} parent=1 // pred_fallthru
      _
    // Predicated region
    $region82: #{dcnv2_forward.1} parent=1 // pred_check
      _
    $region83: #{dcnv2_forward.1} parent=1 // pred_check_branch
      %85 = sbr.rel (0) target = $region85
    $region84: #{dcnv2_forward.1} parent=1 // pred_region
      _
    $region85: #{dcnv2_forward.1} parent=1 // pred_fallthru
      _
    // Predicated region
    $region86: #{dcnv2_forward.1} parent=1 // pred_check
      _
    $region87: #{dcnv2_forward.1} parent=1 // pred_check_branch
      %87 = sbr.rel (0) target = $region89
    $region88: #{dcnv2_forward.1} parent=1 // pred_region
      _
    $region89: #{dcnv2_forward.1} parent=1 // pred_fallthru
      _
    // Predicated region
    $region90: #{dcnv2_forward.1} parent=1 // pred_check
      _
    $region91: #{dcnv2_forward.1} parent=1 // pred_check_branch
      %89 = sbr.rel (0) target = $region93
    $region92: #{dcnv2_forward.1} parent=1 // pred_region
      _
    $region93: #{dcnv2_forward.1} parent=1 // pred_fallthru
      _
    // Predicated region
    $region94: #{dcnv2_forward.1} parent=1 // pred_check
      _
    $region95: #{dcnv2_forward.1} parent=1 // pred_check_branch
      %91 = sbr.rel (0) target = $region97
    $region96: #{dcnv2_forward.1} parent=1 // pred_region
      _
    $region97: #{dcnv2_forward.1} parent=1 // pred_fallthru
      _
    // Predicated region
    $region98: #{dcnv2_forward.1} parent=1 // pred_check
      _
    $region99: #{dcnv2_forward.1} parent=1 // pred_check_branch
      %93 = sbr.rel (0) target = $region101
    $region100: #{dcnv2_forward.1} parent=1 // pred_region
      _
    $region101: #{dcnv2_forward.1} parent=1 // pred_fallthru
      _
    // Predicated region
    $region102: #{dcnv2_forward.1} parent=1 // pred_check
      _
    $region103: #{dcnv2_forward.1} parent=1 // pred_check_branch
      %95 = sbr.rel (0) target = $region105
    $region104: #{dcnv2_forward.1} parent=1 // pred_region
      _
    $region105: #{dcnv2_forward.1} parent=1 // pred_fallthru
      _
    // Predicated region
    $region106: #{dcnv2_forward.1} parent=1 // pred_check
      _
    $region107: #{dcnv2_forward.1} parent=1 // pred_check_branch
      %97 = sbr.rel (0) target = $region109
    $region108: #{dcnv2_forward.1} parent=1 // pred_region
      %99 = dma.done [#allocation4], 2048
    $region109: #{dcnv2_forward.1} parent=1 // pred_fallthru
      _
    %v100 = vld [vmem:[%s0] sm:$0x3]
    %v101 = vld [vmem:[%s1] sm:$0xff]
    %v102 = vld [vmem:[%s1 + $0x8] sm:$0xff]
    %v103 = vld [vmem:[%s1 + $0x10] sm:$0xff]
    %v104 = vld [vmem:[%s1 + $0x18] sm:$0xff]
    %v105 = vld [vmem:[%s1 + $0x20] sm:$0xff]
    %v106 = vld [vmem:[%s1 + $0x28] sm:$0xff]
    %v107 = vld [vmem:[%s1 + $0x30] sm:$0xff]
    %v108 = vld [vmem:[%s1 + $0x38] sm:$0xff]
    %v109 = vld [vmem:[%s1 + $0x40] sm:$0xff]
    %v110 = vld [vmem:[%s1 + $0x48] sm:$0xff]
    %v111 = vld [vmem:[%s1 + $0x50] sm:$0xff]
    %v112 = vld [vmem:[%s1 + $0x58] sm:$0xff]
    %v113 = vld [vmem:[%s1 + $0x60] sm:$0xff]
    %v114 = vld [vmem:[%s1 + $0x68] sm:$0xff]
    %v115 = vld [vmem:[%s1 + $0x70] sm:$0xff]
    %v116 = vld [vmem:[%s1 + $0x78] sm:$0xff]
    %v117 = vld [vmem:[%s2] sm:$0x1]
    %v119 = vperm.slane %v117, 0
    %121 = vmatpush.msra.mxu0 %v116
    %122 = vmatpush.msra.mxu0 %v115
    %123 = vmatpush.msra.mxu0 %v114
    %124 = vmatpush.msra.mxu0 %v113
    %125 = vmatpush.msra.mxu0 %v112
    %126 = vmatpush.msra.mxu0 %v111
    %127 = vmatpush.msra.mxu0 %v110
    %128 = vmatpush.msra.mxu0 %v109
    %129 = vmatpush.msra.mxu0 %v108
    %130 = vmatpush.msra.mxu0 %v107
    %131 = vmatpush.msra.mxu0 %v106
    %132 = vmatpush.msra.mxu0 %v105
    %133 = vmatpush.msra.mxu0 %v104
    %134 = vmatpush.msra.mxu0 %v103
    %135 = vmatpush.msra.mxu0 %v102
    %136 = vmatpush.msra.mxu0 %v101
    %137 = vmatmul.f32.gmra.mxu0 %v100
    %v138 = vpop.f32.mrf.mxu0
    %v139 = vadd.f32 %v119, %v138
    %140 = vdwg.mxu0
    %v141 = vld [vmem:[%s3] sm:$0x1]
    %v142 = vld [vmem:[%s4] sm:$0x1]
    %vm143 = vcmask 1041408
    %v144 = vsel %vm143, %v139, 0.0
    %v145 = vrot.slane %v144, 4
    %v146 = vadd.f32 %v144, %v145
    %v147 = vrot.slane %v146, 2
    %v148 = vadd.f32 %v146, %v147
    %v149 = vrot.slane %v148, 1
    %v150 = vadd.f32 %v148, %v149
    %152 = vrot.lane.b32.xlu0 %v150, 96
    %v153 = vpop.permute.xlu0 %152
    %v155 = vadd.f32 %v150, %v153
    %156 = vrot.lane.b32.xlu0 %v150, 64
    %v157 = vpop.permute.xlu0 %156
    %v159 = vadd.f32 %v155, %v157
    %160 = vrot.lane.b32.xlu0 %v150, 32
    %v161 = vpop.permute.xlu0 %160
    %v163 = vadd.f32 %v159, %v161
    %165 = vrot.lane.b32.xlu0 %v163, 32
    %v166 = vpop.permute.xlu0 %165
    %168 = vrot.lane.b32.xlu0 %v163, 64
    %v169 = vpop.permute.xlu0 %168
    %171 = vrot.lane.b32.xlu0 %v163, 96
    %v172 = vpop.permute.xlu0 %171
    %vm174 = vcmask 261120
    %v175 = vsel %vm174, %v163, %v166
    %vm176 = vcmask 523264
    %v177 = vsel %vm176, %v175, %v169
    %vm178 = vcmask 785408
    %v179 = vsel %vm178, %v177, %v172
    %v180 = vmul.f32 %v179, 0.125
    %v181 = vperm.slane %v180, 0
    %v182 = vsub.f32 %v139, %v181
    %v183 = vmul.f32 %v182, %v182
    %v184 = vsel %vm143, %v183, 0.0
    %v185 = vrot.slane %v184, 4
    %v186 = vadd.f32 %v184, %v185
    %v187 = vrot.slane %v186, 2
    %v188 = vadd.f32 %v186, %v187
    %v189 = vrot.slane %v188, 1
    %v190 = vadd.f32 %v188, %v189
    %192 = vrot.lane.b32.xlu0 %v190, 96
    %v193 = vpop.permute.xlu0 %192
    %v195 = vadd.f32 %v190, %v193
    %196 = vrot.lane.b32.xlu0 %v190, 64
    %v197 = vpop.permute.xlu0 %196
    %v199 = vadd.f32 %v195, %v197
    %200 = vrot.lane.b32.xlu0 %v190, 32
    %v201 = vpop.permute.xlu0 %200
    %v203 = vadd.f32 %v199, %v201
    %205 = vrot.lane.b32.xlu0 %v203, 32
    %v206 = vpop.permute.xlu0 %205
    %208 = vrot.lane.b32.xlu0 %v203, 64
    %v209 = vpop.permute.xlu0 %208
    %211 = vrot.lane.b32.xlu0 %v203, 96
    %v212 = vpop.permute.xlu0 %211
    %v214 = vsel %vm174, %v203, %v206
    %v215 = vsel %vm176, %v214, %v209
    %v216 = vsel %vm178, %v215, %v212
    %v217 = vmul.f32 %v216, 0.125
    %v218 = vadd.f32 %v217, 1e-05
    %v219 = vrsqrt.pop %v218
    %v220 = vmul.f32 %v219, %v218
    %v221 = vmul.f32 %v220, %v219
    %v222 = vmul.f32 0.5, %v221
    %v223 = vsub.f32 1.5, %v222
    %v224 = vmul.f32 %v219, %v223
    %vm225 = vweird.f32 %v218
    %vm226 = vweird.f32 %v219
    %vm227 = vmor %vm225, %vm226
    %v228 = vsel %vm227, %v219, %v224
    %v229 = vperm.slane %v228, 0
    %v230 = vmul.f32 %v182, %v229
    %v232 = vperm.slane %v141, 0
    %v234 = vmul.f32 %v230, %v232
    %v236 = vperm.slane %v142, 0
    %v238 = vadd.f32 %v234, %v236
    %v239 = vmul.f32 %v238, %v100
    %v240 = vadd.f32 %v239, %v100
    %v241 = vld [vmem:[%s5] sm:$0xff]
    %v242 = vld [vmem:[%s5 + $0x8] sm:$0xff]
    %v243 = vld [vmem:[%s5 + $0x10] sm:$0xff]
    %v244 = vld [vmem:[%s5 + $0x18] sm:$0xff]
    %v245 = vld [vmem:[%s5 + $0x20] sm:$0xff]
    %v246 = vld [vmem:[%s5 + $0x28] sm:$0xff]
    %v247 = vld [vmem:[%s5 + $0x30] sm:$0xff]
    %v248 = vld [vmem:[%s5 + $0x38] sm:$0xff]
    %v249 = vld [vmem:[%s5 + $0x40] sm:$0xff]
    %v250 = vld [vmem:[%s5 + $0x48] sm:$0xff]
    %v251 = vld [vmem:[%s5 + $0x50] sm:$0xff]
    %v252 = vld [vmem:[%s5 + $0x58] sm:$0xff]
    %v253 = vld [vmem:[%s5 + $0x60] sm:$0xff]
    %v254 = vld [vmem:[%s5 + $0x68] sm:$0xff]
    %v255 = vld [vmem:[%s5 + $0x70] sm:$0xff]
    %v256 = vld [vmem:[%s5 + $0x78] sm:$0xff]
    %v257 = vld [vmem:[%s6] sm:$0x1]
    %v259 = vperm.slane %v257, 0
    %261 = vmatpush.msra.mxu0 %v256
    %262 = vmatpush.msra.mxu0 %v255
    %263 = vmatpush.msra.mxu0 %v254
    %264 = vmatpush.msra.mxu0 %v253
    %265 = vmatpush.msra.mxu0 %v252
    %266 = vmatpush.msra.mxu0 %v251
    %267 = vmatpush.msra.mxu0 %v250
    %268 = vmatpush.msra.mxu0 %v249
    %269 = vmatpush.msra.mxu0 %v248
    %270 = vmatpush.msra.mxu0 %v247
    %271 = vmatpush.msra.mxu0 %v246
    %272 = vmatpush.msra.mxu0 %v245
    %273 = vmatpush.msra.mxu0 %v244
    %274 = vmatpush.msra.mxu0 %v243
    %275 = vmatpush.msra.mxu0 %v242
    %276 = vmatpush.msra.mxu0 %v241
    %277 = vmatmul.f32.gmra.mxu0 %v240
    %v278 = vpop.f32.mrf.mxu0
    %v279 = vadd.f32 %v259, %v278
    %280 = vdwg.mxu0
    %v281 = vld [vmem:[%s7] sm:$0x1]
    %v282 = vld [vmem:[%s8] sm:$0x1]
    %v283 = vsel %vm143, %v279, 0.0
    %v284 = vrot.slane %v283, 4
    %v285 = vadd.f32 %v283, %v284
    %v286 = vrot.slane %v285, 2
    %v287 = vadd.f32 %v285, %v286
    %v288 = vrot.slane %v287, 1
    %v289 = vadd.f32 %v287, %v288
    %291 = vrot.lane.b32.xlu0 %v289, 96
    %v292 = vpop.permute.xlu0 %291
    %v294 = vadd.f32 %v289, %v292
    %295 = vrot.lane.b32.xlu0 %v289, 64
    %v296 = vpop.permute.xlu0 %295
    %v298 = vadd.f32 %v294, %v296
    %299 = vrot.lane.b32.xlu0 %v289, 32
    %v300 = vpop.permute.xlu0 %299
    %v302 = vadd.f32 %v298, %v300
    %304 = vrot.lane.b32.xlu0 %v302, 32
    %v305 = vpop.permute.xlu0 %304
    %307 = vrot.lane.b32.xlu0 %v302, 64
    %v308 = vpop.permute.xlu0 %307
    %310 = vrot.lane.b32.xlu0 %v302, 96
    %v311 = vpop.permute.xlu0 %310
    %v313 = vsel %vm174, %v302, %v305
    %v314 = vsel %vm176, %v313, %v308
    %v315 = vsel %vm178, %v314, %v311
    %v316 = vmul.f32 %v315, 0.125
    %v317 = vperm.slane %v316, 0
    %v318 = vsub.f32 %v279, %v317
    %v319 = vmul.f32 %v318, %v318
    %v320 = vsel %vm143, %v319, 0.0
    %v321 = vrot.slane %v320, 4
    %v322 = vadd.f32 %v320, %v321
    %v323 = vrot.slane %v322, 2
    %v324 = vadd.f32 %v322, %v323
    %v325 = vrot.slane %v324, 1
    %v326 = vadd.f32 %v324, %v325
    %328 = vrot.lane.b32.xlu0 %v326, 96
    %v329 = vpop.permute.xlu0 %328
    %v331 = vadd.f32 %v326, %v329
    %332 = vrot.lane.b32.xlu0 %v326, 64
    %v333 = vpop.permute.xlu0 %332
    %v335 = vadd.f32 %v331, %v333
    %336 = vrot.lane.b32.xlu0 %v326, 32
    %v337 = vpop.permute.xlu0 %336
    %v339 = vadd.f32 %v335, %v337
    %341 = vrot.lane.b32.xlu0 %v339, 32
    %v342 = vpop.permute.xlu0 %341
    %344 = vrot.lane.b32.xlu0 %v339, 64
    %v345 = vpop.permute.xlu0 %344
    %347 = vrot.lane.b32.xlu0 %v339, 96
    %v348 = vpop.permute.xlu0 %347
    %v350 = vsel %vm174, %v339, %v342
    %v351 = vsel %vm176, %v350, %v345
    %v352 = vsel %vm178, %v351, %v348
    %v353 = vmul.f32 %v352, 0.125
    %v354 = vadd.f32 %v353, 1e-05
    %v355 = vrsqrt.pop %v354
    %v356 = vmul.f32 %v355, %v354
    %v357 = vmul.f32 %v356, %v355
    %v358 = vmul.f32 0.5, %v357
    %v359 = vsub.f32 1.5, %v358
    %v360 = vmul.f32 %v355, %v359
    %vm361 = vweird.f32 %v354
    %vm362 = vweird.f32 %v355
    %vm363 = vmor %vm361, %vm362
    %v364 = vsel %vm363, %v355, %v360
    %v365 = vperm.slane %v364, 0
    %v366 = vmul.f32 %v318, %v365
    %v368 = vperm.slane %v281, 0
    %v370 = vmul.f32 %v366, %v368
    %v372 = vperm.slane %v282, 0
    %v374 = vadd.f32 %v370, %v372
    %v375 = vmul.f32 %v374, %v100
    %v376 = vadd.f32 %v375, %v240
    %v377 = vld [vmem:[%s9] sm:$0xff]
    %v378 = vld [vmem:[%s9 + $0x8] sm:$0xff]
    %v379 = vld [vmem:[%s9 + $0x10] sm:$0xff]
    %v380 = vld [vmem:[%s9 + $0x18] sm:$0xff]
    %v381 = vld [vmem:[%s9 + $0x20] sm:$0xff]
    %v382 = vld [vmem:[%s9 + $0x28] sm:$0xff]
    %v383 = vld [vmem:[%s9 + $0x30] sm:$0xff]
    %v384 = vld [vmem:[%s9 + $0x38] sm:$0xff]
    %v385 = vld [vmem:[%s9 + $0x40] sm:$0xff]
    %v386 = vld [vmem:[%s9 + $0x48] sm:$0xff]
    %v387 = vld [vmem:[%s9 + $0x50] sm:$0xff]
    %v388 = vld [vmem:[%s9 + $0x58] sm:$0xff]
    %v389 = vld [vmem:[%s9 + $0x60] sm:$0xff]
    %v390 = vld [vmem:[%s9 + $0x68] sm:$0xff]
    %v391 = vld [vmem:[%s9 + $0x70] sm:$0xff]
    %v392 = vld [vmem:[%s9 + $0x78] sm:$0xff]
    %v393 = vld [vmem:[%s10] sm:$0x1]
    %v395 = vperm.slane %v393, 0
    %397 = vmatpush.msra.mxu0 %v392
    %398 = vmatpush.msra.mxu0 %v391
    %399 = vmatpush.msra.mxu0 %v390
    %400 = vmatpush.msra.mxu0 %v389
    %401 = vmatpush.msra.mxu0 %v388
    %402 = vmatpush.msra.mxu0 %v387
    %403 = vmatpush.msra.mxu0 %v386
    %404 = vmatpush.msra.mxu0 %v385
    %405 = vmatpush.msra.mxu0 %v384
    %406 = vmatpush.msra.mxu0 %v383
    %407 = vmatpush.msra.mxu0 %v382
    %408 = vmatpush.msra.mxu0 %v381
    %409 = vmatpush.msra.mxu0 %v380
    %410 = vmatpush.msra.mxu0 %v379
    %411 = vmatpush.msra.mxu0 %v378
    %412 = vmatpush.msra.mxu0 %v377
    %413 = vmatmul.f32.gmra.mxu0 %v376
    %v414 = vpop.f32.mrf.mxu0
    %v415 = vadd.f32 %v395, %v414
    %416 = vdwg.mxu0
    %v417 = vld [vmem:[%s11] sm:$0x1]
    %v418 = vld [vmem:[%s12] sm:$0x1]
    %v419 = vsel %vm143, %v415, 0.0
    %v420 = vrot.slane %v419, 4
    %v421 = vadd.f32 %v419, %v420
    %v422 = vrot.slane %v421, 2
    %v423 = vadd.f32 %v421, %v422
    %v424 = vrot.slane %v423, 1
    %v425 = vadd.f32 %v423, %v424
    %427 = vrot.lane.b32.xlu0 %v425, 96
    %v428 = vpop.permute.xlu0 %427
    %v430 = vadd.f32 %v425, %v428
    %431 = vrot.lane.b32.xlu0 %v425, 64
    %v432 = vpop.permute.xlu0 %431
    %v434 = vadd.f32 %v430, %v432
    %435 = vrot.lane.b32.xlu0 %v425, 32
    %v436 = vpop.permute.xlu0 %435
    %v438 = vadd.f32 %v434, %v436
    %440 = vrot.lane.b32.xlu0 %v438, 32
    %v441 = vpop.permute.xlu0 %440
    %443 = vrot.lane.b32.xlu0 %v438, 64
    %v444 = vpop.permute.xlu0 %443
    %446 = vrot.lane.b32.xlu0 %v438, 96
    %v447 = vpop.permute.xlu0 %446
    %v449 = vsel %vm174, %v438, %v441
    %v450 = vsel %vm176, %v449, %v444
    %v451 = vsel %vm178, %v450, %v447
    %v452 = vmul.f32 %v451, 0.125
    %v453 = vperm.slane %v452, 0
    %v454 = vsub.f32 %v415, %v453
    %v455 = vmul.f32 %v454, %v454
    %v456 = vsel %vm143, %v455, 0.0
    %v457 = vrot.slane %v456, 4
    %v458 = vadd.f32 %v456, %v457
    %v459 = vrot.slane %v458, 2
    %v460 = vadd.f32 %v458, %v459
    %v461 = vrot.slane %v460, 1
    %v462 = vadd.f32 %v460, %v461
    %464 = vrot.lane.b32.xlu0 %v462, 96
    %v465 = vpop.permute.xlu0 %464
    %v467 = vadd.f32 %v462, %v465
    %468 = vrot.lane.b32.xlu0 %v462, 64
    %v469 = vpop.permute.xlu0 %468
    %v471 = vadd.f32 %v467, %v469
    %472 = vrot.lane.b32.xlu0 %v462, 32
    %v473 = vpop.permute.xlu0 %472
    %v475 = vadd.f32 %v471, %v473
    %477 = vrot.lane.b32.xlu0 %v475, 32
    %v478 = vpop.permute.xlu0 %477
    %480 = vrot.lane.b32.xlu0 %v475, 64
    %v481 = vpop.permute.xlu0 %480
    %483 = vrot.lane.b32.xlu0 %v475, 96
    %v484 = vpop.permute.xlu0 %483
    %v486 = vsel %vm174, %v475, %v478
    %v487 = vsel %vm176, %v486, %v481
    %v488 = vsel %vm178, %v487, %v484
    %v489 = vmul.f32 %v488, 0.125
    %v490 = vadd.f32 %v489, 1e-05
    %v491 = vrsqrt.pop %v490
    %v492 = vmul.f32 %v491, %v490
    %v493 = vmul.f32 %v492, %v491
    %v494 = vmul.f32 0.5, %v493
    %v495 = vsub.f32 1.5, %v494
    %v496 = vmul.f32 %v491, %v495
    %vm497 = vweird.f32 %v490
    %vm498 = vweird.f32 %v491
    %vm499 = vmor %vm497, %vm498
    %v500 = vsel %vm499, %v491, %v496
    %v501 = vperm.slane %v500, 0
    %v502 = vmul.f32 %v454, %v501
    %v504 = vperm.slane %v417, 0
    %v506 = vmul.f32 %v502, %v504
    %v508 = vperm.slane %v418, 0
    %v510 = vadd.f32 %v506, %v508
    %v511 = vmul.f32 %v510, %v100
    %v512 = vadd.f32 %v511, %v376
    %v513 = vld [vmem:[#allocation3] sm:$0xff]
    %v514 = vld [vmem:[#allocation3 + $0x8] sm:$0xff]
    %v515 = vld [vmem:[#allocation3 + $0x10] sm:$0xff]
    %v516 = vld [vmem:[#allocation3 + $0x18] sm:$0xff]
    %v517 = vld [vmem:[#allocation3 + $0x20] sm:$0xff]
    %v518 = vld [vmem:[#allocation3 + $0x28] sm:$0xff]
    %v519 = vld [vmem:[#allocation3 + $0x30] sm:$0xff]
    %v520 = vld [vmem:[#allocation3 + $0x38] sm:$0xff]
    %v521 = vld [vmem:[#allocation3 + $0x40] sm:$0xff]
    %v522 = vld [vmem:[#allocation3 + $0x48] sm:$0xff]
    %v523 = vld [vmem:[#allocation3 + $0x50] sm:$0xff]
    %v524 = vld [vmem:[#allocation3 + $0x58] sm:$0xff]
    %v525 = vld [vmem:[#allocation3 + $0x60] sm:$0xff]
    %v526 = vld [vmem:[#allocation3 + $0x68] sm:$0xff]
    %v527 = vld [vmem:[#allocation3 + $0x70] sm:$0xff]
    %v528 = vld [vmem:[#allocation3 + $0x78] sm:$0xff]
    %v529 = vld [vmem:[%s14] sm:$0x1]
    %v531 = vperm.slane %v529, 0
    %533 = vmatpush.msra.mxu0 %v528
    %534 = vmatpush.msra.mxu0 %v527
    %535 = vmatpush.msra.mxu0 %v526
    %536 = vmatpush.msra.mxu0 %v525
    %537 = vmatpush.msra.mxu0 %v524
    %538 = vmatpush.msra.mxu0 %v523
    %539 = vmatpush.msra.mxu0 %v522
    %540 = vmatpush.msra.mxu0 %v521
    %541 = vmatpush.msra.mxu0 %v520
    %542 = vmatpush.msra.mxu0 %v519
    %543 = vmatpush.msra.mxu0 %v518
    %544 = vmatpush.msra.mxu0 %v517
    %545 = vmatpush.msra.mxu0 %v516
    %546 = vmatpush.msra.mxu0 %v515
    %547 = vmatpush.msra.mxu0 %v514
    %548 = vmatpush.msra.mxu0 %v513
    %549 = vmatmul.f32.gmra.mxu0 %v100
    %v550 = vpop.f32.mrf.mxu0
    %v551 = vadd.f32 %v531, %v550
    %552 = vdwg.mxu0
    %v553 = vmax.f32 %v551, 0.0
    %v554 = vld [vmem:[%s15] sm:$0x1]
    %v555 = vld [vmem:[%s16] sm:$0x1]
    %v556 = vsel %vm143, %v553, 0.0
    %v557 = vrot.slane %v556, 4
    %v558 = vadd.f32 %v556, %v557
    %v559 = vrot.slane %v558, 2
    %v560 = vadd.f32 %v558, %v559
    %v561 = vrot.slane %v560, 1
    %v562 = vadd.f32 %v560, %v561
    %564 = vrot.lane.b32.xlu0 %v562, 96
    %v565 = vpop.permute.xlu0 %564
    %v567 = vadd.f32 %v562, %v565
    %568 = vrot.lane.b32.xlu0 %v562, 64
    %v569 = vpop.permute.xlu0 %568
    %v571 = vadd.f32 %v567, %v569
    %572 = vrot.lane.b32.xlu0 %v562, 32
    %v573 = vpop.permute.xlu0 %572
    %v575 = vadd.f32 %v571, %v573
    %577 = vrot.lane.b32.xlu0 %v575, 32
    %v578 = vpop.permute.xlu0 %577
    %580 = vrot.lane.b32.xlu0 %v575, 64
    %v581 = vpop.permute.xlu0 %580
    %583 = vrot.lane.b32.xlu0 %v575, 96
    %v584 = vpop.permute.xlu0 %583
    %v586 = vsel %vm174, %v575, %v578
    %v587 = vsel %vm176, %v586, %v581
    %v588 = vsel %vm178, %v587, %v584
    %v589 = vmul.f32 %v588, 0.125
    %v590 = vperm.slane %v589, 0
    %v591 = vsub.f32 %v553, %v590
    %v592 = vmul.f32 %v591, %v591
    %v593 = vsel %vm143, %v592, 0.0
    %v594 = vrot.slane %v593, 4
    %v595 = vadd.f32 %v593, %v594
    %v596 = vrot.slane %v595, 2
    %v597 = vadd.f32 %v595, %v596
    %v598 = vrot.slane %v597, 1
    %v599 = vadd.f32 %v597, %v598
    %601 = vrot.lane.b32.xlu0 %v599, 96
    %v602 = vpop.permute.xlu0 %601
    %v604 = vadd.f32 %v599, %v602
    %605 = vrot.lane.b32.xlu0 %v599, 64
    %v606 = vpop.permute.xlu0 %605
    %v608 = vadd.f32 %v604, %v606
    %609 = vrot.lane.b32.xlu0 %v599, 32
    %v610 = vpop.permute.xlu0 %609
    %v612 = vadd.f32 %v608, %v610
    %614 = vrot.lane.b32.xlu0 %v612, 32
    %v615 = vpop.permute.xlu0 %614
    %617 = vrot.lane.b32.xlu0 %v612, 64
    %v618 = vpop.permute.xlu0 %617
    %620 = vrot.lane.b32.xlu0 %v612, 96
    %v621 = vpop.permute.xlu0 %620
    %v623 = vsel %vm174, %v612, %v615
    %v624 = vsel %vm176, %v623, %v618
    %v625 = vsel %vm178, %v624, %v621
    %v626 = vmul.f32 %v625, 0.125
    %v627 = vadd.f32 %v626, 1e-05
    %v628 = vrsqrt.pop %v627
    %v629 = vmul.f32 %v628, %v627
    %v630 = vmul.f32 %v629, %v628
    %v631 = vmul.f32 0.5, %v630
    %v632 = vsub.f32 1.5, %v631
    %v633 = vmul.f32 %v628, %v632
    %vm634 = vweird.f32 %v627
    %vm635 = vweird.f32 %v628
    %vm636 = vmor %vm634, %vm635
    %v637 = vsel %vm636, %v628, %v633
    %v638 = vperm.slane %v637, 0
    %v639 = vmul.f32 %v591, %v638
    %v641 = vperm.slane %v554, 0
    %v643 = vmul.f32 %v639, %v641
    %v645 = vperm.slane %v555, 0
    %v647 = vadd.f32 %v643, %v645
    %v648 = vld [vmem:[%s17] sm:$0xff]
    %v649 = vld [vmem:[%s17 + $0x8] sm:$0xff]
    %v650 = vld [vmem:[%s17 + $0x10] sm:$0xff]
    %v651 = vld [vmem:[%s17 + $0x18] sm:$0xff]
    %v652 = vld [vmem:[%s17 + $0x20] sm:$0xff]
    %v653 = vld [vmem:[%s17 + $0x28] sm:$0xff]
    %v654 = vld [vmem:[%s17 + $0x30] sm:$0xff]
    %v655 = vld [vmem:[%s17 + $0x38] sm:$0xff]
    %v656 = vld [vmem:[%s17 + $0x40] sm:$0xff]
    %v657 = vld [vmem:[%s17 + $0x48] sm:$0xff]
    %v658 = vld [vmem:[%s17 + $0x50] sm:$0xff]
    %v659 = vld [vmem:[%s17 + $0x58] sm:$0xff]
    %v660 = vld [vmem:[%s17 + $0x60] sm:$0xff]
    %v661 = vld [vmem:[%s17 + $0x68] sm:$0xff]
    %v662 = vld [vmem:[%s17 + $0x70] sm:$0xff]
    %v663 = vld [vmem:[%s17 + $0x78] sm:$0xff]
    %v664 = vld [vmem:[%s18] sm:$0x1]
    %v666 = vperm.slane %v664, 0
    %668 = vmatpush.msra.mxu0 %v663
    %669 = vmatpush.msra.mxu0 %v662
    %670 = vmatpush.msra.mxu0 %v661
    %671 = vmatpush.msra.mxu0 %v660
    %672 = vmatpush.msra.mxu0 %v659
    %673 = vmatpush.msra.mxu0 %v658
    %674 = vmatpush.msra.mxu0 %v657
    %675 = vmatpush.msra.mxu0 %v656
    %676 = vmatpush.msra.mxu0 %v655
    %677 = vmatpush.msra.mxu0 %v654
    %678 = vmatpush.msra.mxu0 %v653
    %679 = vmatpush.msra.mxu0 %v652
    %680 = vmatpush.msra.mxu0 %v651
    %681 = vmatpush.msra.mxu0 %v650
    %682 = vmatpush.msra.mxu0 %v649
    %683 = vmatpush.msra.mxu0 %v648
    %684 = vmatmul.f32.gmra.mxu0 %v647
    %v685 = vpop.f32.mrf.mxu0
    %v686 = vadd.f32 %v666, %v685
    %687 = vdwg.mxu0
    %v688 = vmax.f32 %v686, 0.0
    %v689 = vld [vmem:[%s19] sm:$0x1]
    %v690 = vld [vmem:[%s20] sm:$0x1]
    %vm691 = vcmask 517120
    %v692 = vsel %vm691, %v688, 0.0
    %v693 = vrot.slane %v692, 4
    %v694 = vadd.f32 %v692, %v693
    %v695 = vrot.slane %v694, 2
    %v696 = vadd.f32 %v694, %v695
    %v697 = vrot.slane %v696, 1
    %v698 = vadd.f32 %v696, %v697
    %700 = vrot.lane.b32.xlu0 %v698, 112
    %v701 = vpop.permute.xlu0 %700
    %v703 = vadd.f32 %v698, %v701
    %704 = vrot.lane.b32.xlu0 %v698, 96
    %v705 = vpop.permute.xlu0 %704
    %v707 = vadd.f32 %v703, %v705
    %708 = vrot.lane.b32.xlu0 %v698, 80
    %v709 = vpop.permute.xlu0 %708
    %v711 = vadd.f32 %v707, %v709
    %713 = vrot.lane.b32.xlu0 %v711, 16
    %v714 = vpop.permute.xlu0 %713
    %716 = vrot.lane.b32.xlu0 %v711, 32
    %v717 = vpop.permute.xlu0 %716
    %719 = vrot.lane.b32.xlu0 %v711, 48
    %v720 = vpop.permute.xlu0 %719
    %vm722 = vcmask 130048
    %v723 = vsel %vm722, %v711, %v714
    %v724 = vsel %vm174, %v723, %v717
    %vm725 = vcmask 392192
    %v726 = vsel %vm725, %v724, %v720
    %v727 = vmul.f32 %v726, 0.125
    %v728 = vperm.slane %v727, 0
    %v729 = vsub.f32 %v688, %v728
    %v730 = vmul.f32 %v729, %v729
    %v731 = vsel %vm691, %v730, 0.0
    %v732 = vrot.slane %v731, 4
    %v733 = vadd.f32 %v731, %v732
    %v734 = vrot.slane %v733, 2
    %v735 = vadd.f32 %v733, %v734
    %v736 = vrot.slane %v735, 1
    %v737 = vadd.f32 %v735, %v736
    %739 = vrot.lane.b32.xlu0 %v737, 112
    %v740 = vpop.permute.xlu0 %739
    %v742 = vadd.f32 %v737, %v740
    %743 = vrot.lane.b32.xlu0 %v737, 96
    %v744 = vpop.permute.xlu0 %743
    %v746 = vadd.f32 %v742, %v744
    %747 = vrot.lane.b32.xlu0 %v737, 80
    %v748 = vpop.permute.xlu0 %747
    %v750 = vadd.f32 %v746, %v748
    %752 = vrot.lane.b32.xlu0 %v750, 16
    %v753 = vpop.permute.xlu0 %752
    %755 = vrot.lane.b32.xlu0 %v750, 32
    %v756 = vpop.permute.xlu0 %755
    %758 = vrot.lane.b32.xlu0 %v750, 48
    %v759 = vpop.permute.xlu0 %758
    %v761 = vsel %vm722, %v750, %v753
    %v762 = vsel %vm174, %v761, %v756
    %v763 = vsel %vm725, %v762, %v759
    %v764 = vmul.f32 %v763, 0.125
    %v765 = vadd.f32 %v764, 1e-05
    %v766 = vrsqrt.pop %v765
    %v767 = vmul.f32 %v766, %v765
    %v768 = vmul.f32 %v767, %v766
    %v769 = vmul.f32 0.5, %v768
    %v770 = vsub.f32 1.5, %v769
    %v771 = vmul.f32 %v766, %v770
    %vm772 = vweird.f32 %v765
    %vm773 = vweird.f32 %v766
    %vm774 = vmor %vm772, %vm773
    %v775 = vsel %vm774, %v766, %v771
    %v776 = vperm.slane %v775, 0
    %v777 = vmul.f32 %v729, %v776
    %v779 = vperm.slane %v689, 0
    %v781 = vmul.f32 %v777, %v779
    %v783 = vperm.slane %v690, 0
    %v785 = vadd.f32 %v781, %v783
    %v786 = vld [vmem:[%s21] sm:$0xff]
    %v787 = vld [vmem:[%s21 + $0x8] sm:$0xff]
    %v788 = vld [vmem:[%s21 + $0x10] sm:$0xff]
    %v789 = vld [vmem:[%s21 + $0x18] sm:$0xff]
    %v790 = vld [vmem:[%s21 + $0x20] sm:$0xff]
    %v791 = vld [vmem:[%s21 + $0x28] sm:$0xff]
    %v792 = vld [vmem:[%s21 + $0x30] sm:$0xff]
    %v793 = vld [vmem:[%s21 + $0x38] sm:$0xff]
    %v794 = vld [vmem:[%s21 + $0x40] sm:$0xff]
    %v795 = vld [vmem:[%s21 + $0x48] sm:$0xff]
    %v796 = vld [vmem:[%s21 + $0x50] sm:$0xff]
    %v797 = vld [vmem:[%s21 + $0x58] sm:$0xff]
    %v798 = vld [vmem:[%s21 + $0x60] sm:$0xff]
    %v799 = vld [vmem:[%s21 + $0x68] sm:$0xff]
    %v800 = vld [vmem:[%s21 + $0x70] sm:$0xff]
    %v801 = vld [vmem:[%s21 + $0x78] sm:$0xff]
    %v802 = vld [vmem:[%s22] sm:$0xff]
    %v803 = vld [vmem:[%s22 + $0x8] sm:$0xff]
    %v804 = vld [vmem:[%s22 + $0x10] sm:$0xff]
    %v805 = vld [vmem:[%s22 + $0x18] sm:$0xff]
    %v806 = vld [vmem:[%s22 + $0x20] sm:$0xff]
    %v807 = vld [vmem:[%s22 + $0x28] sm:$0xff]
    %v808 = vld [vmem:[%s22 + $0x30] sm:$0xff]
    %v809 = vld [vmem:[%s22 + $0x38] sm:$0xff]
    %v811 = vsel %vm176, %v785, 0
    %813 = vmatpush.msra.mxu0 0.0
    %814 = vmatpush.msra.mxu0 0.0
    %815 = vmatpush.msra.mxu0 0.0
    %816 = vmatpush.msra.mxu0 0.0
    %817 = vmatpush.msra.mxu0 0.0
    %818 = vmatpush.msra.mxu0 0.0
    %819 = vmatpush.msra.mxu0 0.0
    %820 = vmatpush.msra.mxu0 0.0
    %821 = vmatpush.msra.mxu0 %v809
    %822 = vmatpush.msra.mxu0 %v808
    %823 = vmatpush.msra.mxu0 %v807
    %824 = vmatpush.msra.mxu0 %v806
    %825 = vmatpush.msra.mxu0 %v805
    %826 = vmatpush.msra.mxu0 %v804
    %827 = vmatpush.msra.mxu0 %v803
    %828 = vmatpush.msra.mxu0 %v802
    %829 = vmatmul.f32.gmra.mxu0 %v811
    %v830 = vpop.f32.mrf.mxu0
    %v831 = vadd.f32 0.0, %v830
    %832 = vdwg.mxu0
    %833 = vmatpush.msra.mxu0 %v801
    %834 = vmatpush.msra.mxu0 %v800
    %835 = vmatpush.msra.mxu0 %v799
    %836 = vmatpush.msra.mxu0 %v798
    %837 = vmatpush.msra.mxu0 %v797
    %838 = vmatpush.msra.mxu0 %v796
    %839 = vmatpush.msra.mxu0 %v795
    %840 = vmatpush.msra.mxu0 %v794
    %841 = vmatpush.msra.mxu0 %v793
    %842 = vmatpush.msra.mxu0 %v792
    %843 = vmatpush.msra.mxu0 %v791
    %844 = vmatpush.msra.mxu0 %v790
    %845 = vmatpush.msra.mxu0 %v789
    %846 = vmatpush.msra.mxu0 %v788
    %847 = vmatpush.msra.mxu0 %v787
    %848 = vmatpush.msra.mxu0 %v786
    %849 = vmatmul.f32.gmra.mxu0 %v512
    %v850 = vpop.f32.mrf.mxu0
    %v851 = vadd.f32 %v831, %v850
    %852 = vdwg.mxu0
    %v853 = vld [vmem:[%s23] sm:$0x1]
    %v855 = vperm.slane %v853, 0
    %v857 = vadd.f32 %v851, %v855
    %v858 = vmax.f32 %v857, 0.0
    %v859 = vld [vmem:[%s24] sm:$0xff]
    %v860 = vld [vmem:[%s24 + $0x8] sm:$0xff]
    %v861 = vld [vmem:[%s24 + $0x10] sm:$0xff]
    %v862 = vld [vmem:[%s24 + $0x18] sm:$0xff]
    %v863 = vld [vmem:[%s24 + $0x20] sm:$0xff]
    %v864 = vld [vmem:[%s24 + $0x28] sm:$0xff]
    %v865 = vld [vmem:[%s24 + $0x30] sm:$0xff]
    %v866 = vld [vmem:[%s24 + $0x38] sm:$0xff]
    %s867 = sld [smem:[#allocation2]]
    %v868 = vstv %s867
    %v870 = vsel %vm176, %v858, 0
    %872 = vmatpush.msra.mxu0 0.0
    %873 = vmatpush.msra.mxu0 0.0
    %874 = vmatpush.msra.mxu0 0.0
    %875 = vmatpush.msra.mxu0 0.0
    %876 = vmatpush.msra.mxu0 0.0
    %877 = vmatpush.msra.mxu0 0.0
    %878 = vmatpush.msra.mxu0 0.0
    %879 = vmatpush.msra.mxu0 0.0
    %880 = vmatpush.msra.mxu0 %v866
    %881 = vmatpush.msra.mxu0 %v865
    %882 = vmatpush.msra.mxu0 %v864
    %883 = vmatpush.msra.mxu0 %v863
    %884 = vmatpush.msra.mxu0 %v862
    %885 = vmatpush.msra.mxu0 %v861
    %886 = vmatpush.msra.mxu0 %v860
    %887 = vmatpush.msra.mxu0 %v859
    %888 = vmatmul.f32.gmra.mxu0 %v870
    %v889 = vpop.f32.mrf.mxu0
    %v890 = vadd.f32 %v868, %v889
    %891 = vdwg.mxu0
    %v892 = vxor.u32 %v890, 2147483648
    %v893 = vmul.f32 %v892, 1.442695
    %v894 = vpow.pop %v893
    %v895 = vadd.f32 %v894, 1.0
    %v896 = vrcp.pop %v895
    %v897 = vmul.f32 %v895, %v896
    %v898 = vsub.f32 1.0, %v897
    %v899 = vmul.f32 %v896, %v898
    %v900 = vadd.f32 %v896, %v899
    %vm901 = vweird.f32 %v895
    %vm902 = vweird.f32 %v896
    %vm903 = vmor %vm901, %vm902
    %v904 = vsel %vm903, %v896, %v900
    %v905 = vand.u32 2147483647, %v895
    %vm906 = vcmp.eq.f32.partialorder %v905, 8.507059e+37
    %v907 = vand.u32 %v895, 2147483648
    %v908 = vor.u32 1.1754944e-38, %v907
    %v909 = vsel %vm906, %v908, %v904
    %v910 = vmul.f32 1.0, %v909
    %vm911 = vcmask 25600
    %912 = vst.msk [vmem:[%s26] sm:$0x3] %vm911, %v910
    // Predicated region
    $region110: #{dcnv2_forward.1} parent=1 // pred_check
      _
    $region111: #{dcnv2_forward.1} parent=1 // pred_check_branch
      %914 = sbr.rel (0) target = $region113
    $region112: #{dcnv2_forward.1} parent=1 // pred_region
      _
    $region113: #{dcnv2_forward.1} parent=1 // pred_fallthru
      _
    // Predicated region
    $region114: #{dcnv2_forward.1} parent=1 // pred_check
      _
    $region115: #{dcnv2_forward.1} parent=1 // pred_check_branch
      %916 = sbr.rel (0) target = $region117
    $region116: #{dcnv2_forward.1} parent=1 // pred_region
      _
    $region117: #{dcnv2_forward.1} parent=1 // pred_fallthru
      _
    %917 = vsyncpa [#allocation4], 1

</llo_original>
